<compile_context>
chip_gen: v7x
topology: tpu7x:2x2x1
jax: 0.10.0
libtpu: 0.0.40
codegen_flags: <defaults>
</compile_context>

<pallas_src>
import functools

import jax
import jax.numpy as jnp
from jax.experimental import pallas as pl
from jax.experimental.pallas import tpu as pltpu

_MASK_PAD = -1e9  # additive-mask value for padded key positions


def _round_up(v, m):
    return (v + m - 1) // m * m


def _vmem_limit_bytes():
    """Per-generation VMEM budget: ~55% of physical VMEM, capped at 80 MiB."""
    cap = 64 * 1024 * 1024  # conservative fallback (v7x physical)
    try:
        info = pltpu.get_tpu_info()
        cap = int(getattr(info, "vmem_capacity_bytes", cap) or cap)
    except Exception:
        pass
    return int(min(cap * 0.55, 80 * 1024 * 1024))


def _choose_tiles(n, q_block, kv_block):
    """Pick bf16-friendly (tq, tk, n_pad).  q_block/kv_block: pow-2 multiples of 128."""
    assert q_block % 128 == 0 and kv_block % 128 == 0
    assert q_block % kv_block == 0 or kv_block % q_block == 0
    blk = max(q_block, kv_block)
    if n >= blk:
        return q_block, kv_block, _round_up(n, blk)
    # Short sequence: one (padded) full-extent tile, 16-sublane aligned for bf16.
    n_pad = _round_up(n, 16)
    return n_pad, n_pad, n_pad


def _weight_spec(block_shape, index_map, single_buffer):
    if single_buffer:
        return pl.BlockSpec(block_shape, index_map, pipeline_mode=pl.Buffered(1))
    return pl.BlockSpec(block_shape, index_map)


# ----------------------------- kernel 1: LN + QKV ----------------------------
def _ln_qkv_kernel(x_ref, gamma_ref, beta_ref, wqkv_ref, q_ref, k_ref, v_ref,
                   *, inner, eps=1e-5):
    x = x_ref[0]                                          # (tq, D) f32
    # LayerNorm (biased variance, eps=1e-5, like torch.nn.LayerNorm); f32 math.
    mean = jnp.mean(x, axis=-1, keepdims=True)
    var = jnp.mean(jnp.square(x - mean), axis=-1, keepdims=True)
    xn = (x - mean) * jax.lax.rsqrt(var + eps)
    xn = xn * gamma_ref[0] + beta_ref[0]                  # (tq, D)

    # Fused QKV projection: bf16 MXU inputs, f32 accumulation.  The softmax
    # scale is already folded into the Q columns of wqkv (wrapper side).
    qkv = jnp.dot(xn.astype(wqkv_ref.dtype), wqkv_ref[...],
                  preferred_element_type=jnp.float32)     # (tq, 3*inner) f32

    # Lane-dense (tq, inner) stores — no per-head narrow stores.
    q_ref[0] = qkv[:, :inner].astype(q_ref.dtype)
    k_ref[0] = qkv[:, inner:2 * inner].astype(k_ref.dtype)
    v_ref[0] = qkv[:, 2 * inner:].astype(v_ref.dtype)


# --------------------- kernel 2: flash attention + W_out ---------------------
def _flash_attention_kernel(q_ref, k_ref, v_ref, mask_ref, wout_ref, o_ref,
                            m_ref, l_ref, acc_ref, *, heads, dim_head):
    kv = pl.program_id(2)
    num_kv = pl.num_programs(2)

    @pl.when(kv == 0)
    def _reset():
        # Finite "neg-inf": robust even if a query row is fully masked.
        m_ref[...] = jnp.full_like(m_ref, -1e30)
        l_ref[...] = jnp.zeros_like(l_ref)
        acc_ref[...] = jnp.zeros_like(acc_ref)

    # Additive mask tile, fetched once per grid step and shared by all heads.
    mask_tile = mask_ref[0].astype(jnp.float32)           # (tq, tk)

    for h in range(heads):                                # static small loop
        lo = h * dim_head
        q = q_ref[0, :, lo:lo + dim_head]                 # (tq, Dh) bf16 (pre-scaled)
        k = k_ref[0, :, lo:lo + dim_head]                 # (tk, Dh) bf16
        v = v_ref[0, :, lo:lo + dim_head]                 # (tk, Dh) bf16

        # q @ k^T without materialising a transpose (NT matmul on the MXU).
        s = jax.lax.dot_general(q, k, (((1,), (1,)), ((), ())),
                                preferred_element_type=jnp.float32)
        s = s + mask_tile                                  # (tq, tk) f32

        m_prev = m_ref[:, h:h + 1]                         # (tq, 1)
        m_new = jnp.maximum(m_prev, jnp.max(s, axis=-1, keepdims=True))
        alpha = jnp.exp(m_prev - m_new)
        p = jnp.exp(s - m_new)                             # (tq, tk) f32
        l_ref[:, h:h + 1] = alpha * l_ref[:, h:h + 1] + jnp.sum(p, axis=-1,
                                                                keepdims=True)
        acc_ref[:, lo:lo + dim_head] = alpha * acc_ref[:, lo:lo + dim_head] + jnp.dot(
            p.astype(v.dtype), v, preferred_element_type=jnp.float32)
        m_ref[:, h:h + 1] = m_new

    @pl.when(kv == num_kv - 1)
    def _finalize():
        # Fold 1/l into the per-head context (EUP approx reciprocal), then a
        # single fused (tq, inner) @ (inner, D) output projection: full MXU
        # contraction depth, one matmul launch, no reassembly transpose.
        for h in range(heads):
            lo = h * dim_head
            inv_l = pl.reciprocal(l_ref[:, h:h + 1], approx=True)
            acc_ref[:, lo:lo + dim_head] = acc_ref[:, lo:lo + dim_head] * inv_l
        ctx = acc_ref[...].astype(wout_ref.dtype)          # (tq, inner) bf16
        o_ref[0] = jnp.dot(ctx, wout_ref[...],
                           preferred_element_type=jnp.float32).astype(o_ref.dtype)


# --------------------------------- wrapper -----------------------------------
def _attention_forward(x, mask, gamma, beta, w_qkv, w_out, *, heads, dim_head,
                       q_block, kv_block, compute_dtype, single_buffer_weights):
    b, n, d = x.shape
    inner = heads * dim_head
    assert mask.shape == (b, n, n), "only the 3-D mask branch is implemented"
    assert w_qkv.shape == (d, 3 * inner)
    assert w_out.shape == (inner, d)

    gamma2 = jnp.asarray(gamma, jnp.float32).reshape(1, d)
    beta2 = jnp.asarray(beta, jnp.float32).reshape(1, d)

    # Fold the 1/sqrt(dim_head) softmax scale into the Q slice of W_qkv; feed
    # the MXU bf16 weights.  The mask keeps its own dtype (f32-safe for
    # real-valued biases); scores/softmax stay f32 inside the kernel.
    scale = dim_head ** (-0.5)
    w_qkv_s = w_qkv.at[:, :inner].multiply(scale).astype(compute_dtype)
    w_out_c = w_out.astype(compute_dtype)

    tq, tk, n_pad = _choose_tiles(n, q_block, kv_block)
    if n_pad != n:
        pad = n_pad - n
        x = jnp.pad(x, ((0, 0), (0, pad), (0, 0)))
        mask = jnp.pad(mask, ((0, 0), (0, pad), (0, pad)),
                       constant_values=_MASK_PAD)
    num_q, num_kv = n_pad // tq, n_pad // tk
    vmem_limit = _vmem_limit_bytes()

    # ---- kernel 1: LayerNorm + QKV projection (lane-dense bf16 outputs) ----
    qkv_shape = jax.ShapeDtypeStruct((b, n_pad, inner), compute_dtype)
    q, k, v = pl.pallas_call(
        functools.partial(_ln_qkv_kernel, inner=inner),
        out_shape=(qkv_shape, qkv_shape, qkv_shape),
        grid_spec=pltpu.PrefetchScalarGridSpec(
            num_scalar_prefetch=0,
            grid=(b, num_q),
            in_specs=[
                pl.BlockSpec((1, tq, d), lambda bi, qi: (bi, qi, 0)),        # x
                pl.BlockSpec((1, d), lambda bi, qi: (0, 0)),                 # gamma
                pl.BlockSpec((1, d), lambda bi, qi: (0, 0)),                 # beta
                _weight_spec((d, 3 * inner), lambda bi, qi: (0, 0),
                             single_buffer_weights),                         # W_qkv
            ],
            out_specs=(
                pl.BlockSpec((1, tq, inner), lambda bi, qi: (bi, qi, 0)),
                pl.BlockSpec((1, tq, inner), lambda bi, qi: (bi, qi, 0)),
                pl.BlockSpec((1, tq, inner), lambda bi, qi: (bi, qi, 0)),
            ),
        ),
        compiler_params=pltpu.CompilerParams(
            dimension_semantics=("parallel", "parallel"),
            vmem_limit_bytes=vmem_limit),
    )(x, gamma2, beta2, w_qkv_s)

    # ---- kernel 2: flash attention (online softmax) + output projection ----
    out = pl.pallas_call(
        functools.partial(_flash_attention_kernel, heads=heads, dim_head=dim_head),
        out_shape=jax.ShapeDtypeStruct((b, n_pad, d), x.dtype),
        grid_spec=pltpu.PrefetchScalarGridSpec(
            num_scalar_prefetch=0,
            grid=(b, num_q, num_kv),
            in_specs=[
                pl.BlockSpec((1, tq, inner), lambda bi, qi, ki: (bi, qi, 0)),   # q
                pl.BlockSpec((1, tk, inner), lambda bi, qi, ki: (bi, ki, 0)),   # k
                pl.BlockSpec((1, tk, inner), lambda bi, qi, ki: (bi, ki, 0)),   # v
                pl.BlockSpec((1, tq, tk), lambda bi, qi, ki: (bi, qi, ki)),     # mask
                _weight_spec((inner, d), lambda bi, qi, ki: (0, 0),
                             single_buffer_weights),                            # W_out
            ],
            out_specs=pl.BlockSpec((1, tq, d), lambda bi, qi, ki: (bi, qi, 0)),
            scratch_shapes=[
                pltpu.VMEM((tq, heads), jnp.float32),   # running max m (lane-dense)
                pltpu.VMEM((tq, heads), jnp.float32),   # running sum l (lane-dense)
                pltpu.VMEM((tq, inner), jnp.float32),   # running PV acc (lane-dense)
            ],
        ),
        compiler_params=pltpu.CompilerParams(
            dimension_semantics=("parallel", "parallel", "arbitrary"),
            vmem_limit_bytes=vmem_limit),
    )(q, k, v, mask, w_out_c)

    if n_pad != n:
        out = out[:, :n, :]
    return out


def attention_forward(x, mask, gamma, beta, w_qkv, w_out, *, heads, dim_head,
                      q_block=256, kv_block=256, compute_dtype=jnp.bfloat16):
    """x: (B, N, D); mask: (B, N, N) additive mask (broadcast over heads)."""
    kwargs = dict(heads=heads, dim_head=dim_head, q_block=q_block,
                  kv_block=kv_block, compute_dtype=compute_dtype)
    try:
        out = _attention_forward(x, mask, gamma, beta, w_qkv, w_out,
                                 single_buffer_weights=True, **kwargs)
        return jax.block_until_ready(out)
    except Exception:
        # Fallback if this JAX build rejects pl.Buffered(1) single-buffering
        # of the grid-invariant weight blocks.
        out = _attention_forward(x, mask, gamma, beta, w_qkv, w_out,
                                 single_buffer_weights=False, **kwargs)
        return jax.block_until_ready(out)


# -------------------------------- reference ----------------------------------
def _reference(x, mask, gamma, beta, w_qkv, w_out, heads, dim_head, eps=1e-5):
    b, n, d = x.shape
    inner = heads * dim_head
    mean = jnp.mean(x, axis=-1, keepdims=True)
    var = jnp.mean((x - mean) ** 2, axis=-1, keepdims=True)
    xn = (x - mean) / jnp.sqrt(var + eps) * gamma + beta
    qkv = xn @ w_qkv
    q, k, v = jnp.split(qkv, 3, axis=-1)

    def split_heads(t):
        return t.reshape(b, n, heads, dim_head).transpose(0, 2, 1, 3)

    q, k, v = map(split_heads, (q, k, v))
    dots = jnp.einsum('bhnd,bhmd->bhnm', q, k) * (dim_head ** -0.5)
    dots = dots + mask[:, None, :, :]
    attn = jax.nn.softmax(dots, axis=-1)
    out = jnp.einsum('bhnm,bhmd->bhnd', attn, v)
    out = out.transpose(0, 2, 1, 3).reshape(b, n, inner)
    return out @ w_out


if __name__ == "__main__":
    # Small shapes consistent with the module's forward.
    B, N, D = 2, 8, 32
    HEADS, DIM_HEAD = 4, 16
    INNER = HEADS * DIM_HEAD

    key = jax.random.PRNGKey(0)
    k_x, k_m, k_qkv, k_out, k_g, k_b = jax.random.split(key, 6)

    x = jax.random.normal(k_x, (B, N, D), dtype=jnp.float32)
    # additive attention mask, (B, N, N): 0 for keep, -1e9 for masked
    mask_bits = jax.random.bernoulli(k_m, p=0.15, shape=(B, N, N))
    mask = jnp.where(mask_bits, -1e9, 0.0).astype(jnp.float32)

    # Deterministic synthetic parameters (shapes from __init__).
    w_qkv = jax.random.normal(k_qkv, (D, 3 * INNER), dtype=jnp.float32) * (D ** -0.5)
    w_out = jax.random.normal(k_out, (INNER, D), dtype=jnp.float32) * (INNER ** -0.5)
    gamma = 1.0 + 0.1 * jax.random.normal(k_g, (D,), dtype=jnp.float32)
    beta = 0.1 * jax.random.normal(k_b, (D,), dtype=jnp.float32)

    out = attention_forward(x, mask, gamma, beta, w_qkv, w_out,
                            heads=HEADS, dim_head=DIM_HEAD)
    out = jax.block_until_ready(out)

    ref = _reference(x, mask, gamma, beta, w_qkv, w_out, HEADS, DIM_HEAD)
    assert out.shape == (B, N, D)
    max_err = jnp.max(jnp.abs(out - ref))
    # bf16 MXU inputs + approx reciprocal -> compare at bf16-level tolerance.
    assert jnp.allclose(out, ref, atol=5e-2, rtol=5e-2), (
        f"mismatch vs reference (max abs err {max_err})")

    print("KERNEL_OK")
</pallas_src>

<mosaic_0001>
module attributes {stable_mosaic.version = 11 : i64} {
  func.func @_ln_qkv_kernel(%arg0: i32, %arg1: i32, %arg2: memref<1x16x32xf32, #tpu.memory_space<vmem>>, %arg3: memref<1x32xf32, #tpu.memory_space<vmem>>, %arg4: memref<1x32xf32, #tpu.memory_space<vmem>>, %arg5: memref<32x192xbf16, #tpu.memory_space<vmem>>, %arg6: memref<1x16x64xbf16, #tpu.memory_space<vmem>>, %arg7: memref<1x16x64xbf16, #tpu.memory_space<vmem>>, %arg8: memref<1x16x64xbf16, #tpu.memory_space<vmem>>) attributes {dimension_semantics = [#tpu.dimension_semantics<parallel>, #tpu.dimension_semantics<parallel>], iteration_bounds = array<i64: 2, 1>, scalar_prefetch = 0 : i64, scratch_operands = 0 : i64, tpu.core_type = #tpu.core_type<tc>, window_params = [{transform_indices = @transform_0, window_bounds = array<i64: 1, 16, 32>}, {pipeline_mode = #tpu.pipeline_mode<synchronous>, transform_indices = @transform_1, window_bounds = array<i64: 1, 32>}, {pipeline_mode = #tpu.pipeline_mode<synchronous>, transform_indices = @transform_2, window_bounds = array<i64: 1, 32>}, {pipeline_mode = #tpu.pipeline_mode<synchronous>, transform_indices = @transform_3, window_bounds = array<i64: 32, 192>}, {transform_indices = @transform_4, window_bounds = array<i64: 1, 16, 64>}, {transform_indices = @transform_5, window_bounds = array<i64: 1, 16, 64>}, {transform_indices = @transform_6, window_bounds = array<i64: 1, 16, 64>}]} {
    %c0 = arith.constant 0 : index
    %c0_0 = arith.constant 0 : index
    %c0_1 = arith.constant 0 : index
    %0 = vector.load %arg2[%c0, %c0_0, %c0_1] : memref<1x16x32xf32, #tpu.memory_space<vmem>>, vector<1x16x32xf32>
    %1 = vector.shape_cast %0 : vector<1x16x32xf32> to vector<16x32xf32>
    %cst = arith.constant dense<0.000000e+00> : vector<16xf32>
    %2 = vector.multi_reduction <add>, %1, %cst [1] : vector<16x32xf32> to vector<16xf32>
    %3 = vector.shape_cast %2 : vector<16xf32> to vector<16x1xf32>
    %cst_2 = arith.constant 3.200000e+01 : f32
    %4 = vector.broadcast %cst_2 : f32 to vector<16x1xf32>
    %5 = arith.divf %3, %4 : vector<16x1xf32>
    %6 = vector.broadcast %5 : vector<16x1xf32> to vector<16x32xf32>
    %7 = arith.subf %1, %6 : vector<16x32xf32>
    %8 = arith.mulf %7, %7 : vector<16x32xf32>
    %cst_3 = arith.constant dense<0.000000e+00> : vector<16xf32>
    %9 = vector.multi_reduction <add>, %8, %cst_3 [1] : vector<16x32xf32> to vector<16xf32>
    %10 = vector.shape_cast %9 : vector<16xf32> to vector<16x1xf32>
    %cst_4 = arith.constant 3.200000e+01 : f32
    %11 = vector.broadcast %cst_4 : f32 to vector<16x1xf32>
    %12 = arith.divf %10, %11 : vector<16x1xf32>
    %13 = vector.broadcast %5 : vector<16x1xf32> to vector<16x32xf32>
    %14 = arith.subf %1, %13 : vector<16x32xf32>
    %cst_5 = arith.constant 9.99999974E-6 : f32
    %15 = vector.broadcast %cst_5 : f32 to vector<16x1xf32>
    %16 = arith.addf %12, %15 : vector<16x1xf32>
    %17 = math.rsqrt %16 : vector<16x1xf32>
    %18 = vector.broadcast %17 : vector<16x1xf32> to vector<16x32xf32>
    %19 = arith.mulf %14, %18 : vector<16x32xf32>
    %c0_6 = arith.constant 0 : index
    %c0_7 = arith.constant 0 : index
    %20 = vector.load %arg3[%c0_6, %c0_7] : memref<1x32xf32, #tpu.memory_space<vmem>>, vector<1x32xf32>
    %21 = vector.shape_cast %20 : vector<1x32xf32> to vector<32xf32>
    %22 = vector.shape_cast %21 : vector<32xf32> to vector<1x32xf32>
    %23 = vector.broadcast %22 : vector<1x32xf32> to vector<16x32xf32>
    %24 = arith.mulf %19, %23 : vector<16x32xf32>
    %c0_8 = arith.constant 0 : index
    %c0_9 = arith.constant 0 : index
    %25 = vector.load %arg4[%c0_8, %c0_9] : memref<1x32xf32, #tpu.memory_space<vmem>>, vector<1x32xf32>
    %26 = vector.shape_cast %25 : vector<1x32xf32> to vector<32xf32>
    %27 = vector.shape_cast %26 : vector<32xf32> to vector<1x32xf32>
    %28 = vector.broadcast %27 : vector<1x32xf32> to vector<16x32xf32>
    %29 = arith.addf %24, %28 : vector<16x32xf32>
    %30 = arith.truncf %29 : vector<16x32xf32> to vector<16x32xbf16>
    %c0_10 = arith.constant 0 : index
    %c0_11 = arith.constant 0 : index
    %31 = vector.load %arg5[%c0_10, %c0_11] : memref<32x192xbf16, #tpu.memory_space<vmem>>, vector<32x192xbf16>
    %cst_12 = arith.constant dense<0.000000e+00> : vector<16x192xf32>
    %32 = tpu.matmul %30, %31, %cst_12 {dimension_numbers = #tpu.dot_dimension_numbers<[1], [0], [0], [1], [0, 0, 1, 1], [], []>} : vector<16x32xbf16>, vector<32x192xbf16>, vector<16x192xf32> -> vector<16x192xf32>
    %33 = vector.extract_strided_slice %32 {offsets = [0, 0], sizes = [16, 64], strides = [1, 1]} : vector<16x192xf32> to vector<16x64xf32>
    %34 = arith.truncf %33 : vector<16x64xf32> to vector<16x64xbf16>
    %c0_13 = arith.constant 0 : index
    %c0_14 = arith.constant 0 : index
    %c0_15 = arith.constant 0 : index
    %35 = vector.load %arg6[%c0_13, %c0_14, %c0_15] : memref<1x16x64xbf16, #tpu.memory_space<vmem>>, vector<1x16x64xbf16>
    %36 = vector.shape_cast %35 : vector<1x16x64xbf16> to vector<16x64xbf16>
    %37 = vector.shape_cast %34 : vector<16x64xbf16> to vector<1x16x64xbf16>
    tpu.vector_store %arg6[%c0_13, %c0_14, %c0_15], %37 {strides = array<i32>} : memref<1x16x64xbf16, #tpu.memory_space<vmem>>, vector<1x16x64xbf16>,
    %38 = vector.extract_strided_slice %32 {offsets = [0, 64], sizes = [16, 64], strides = [1, 1]} : vector<16x192xf32> to vector<16x64xf32>
    %39 = arith.truncf %38 : vector<16x64xf32> to vector<16x64xbf16>
    %c0_16 = arith.constant 0 : index
    %c0_17 = arith.constant 0 : index
    %c0_18 = arith.constant 0 : index
    %40 = vector.load %arg7[%c0_16, %c0_17, %c0_18] : memref<1x16x64xbf16, #tpu.memory_space<vmem>>, vector<1x16x64xbf16>
    %41 = vector.shape_cast %40 : vector<1x16x64xbf16> to vector<16x64xbf16>
    %42 = vector.shape_cast %39 : vector<16x64xbf16> to vector<1x16x64xbf16>
    tpu.vector_store %arg7[%c0_16, %c0_17, %c0_18], %42 {strides = array<i32>} : memref<1x16x64xbf16, #tpu.memory_space<vmem>>, vector<1x16x64xbf16>,
    %43 = vector.extract_strided_slice %32 {offsets = [0, 128], sizes = [16, 64], strides = [1, 1]} : vector<16x192xf32> to vector<16x64xf32>
    %44 = arith.truncf %43 : vector<16x64xf32> to vector<16x64xbf16>
    %c0_19 = arith.constant 0 : index
    %c0_20 = arith.constant 0 : index
    %c0_21 = arith.constant 0 : index
    %45 = vector.load %arg8[%c0_19, %c0_20, %c0_21] : memref<1x16x64xbf16, #tpu.memory_space<vmem>>, vector<1x16x64xbf16>
    %46 = vector.shape_cast %45 : vector<1x16x64xbf16> to vector<16x64xbf16>
    %47 = vector.shape_cast %44 : vector<16x64xbf16> to vector<1x16x64xbf16>
    tpu.vector_store %arg8[%c0_19, %c0_20, %c0_21], %47 {strides = array<i32>} : memref<1x16x64xbf16, #tpu.memory_space<vmem>>, vector<1x16x64xbf16>,
    return
  }
  func.func @transform_0(%arg0: i32, %arg1: i32) -> (i32, i32, i32) {
    %c0_i32 = arith.constant 0 : i32
    %c0_i32_0 = arith.constant 0 : i32
    return %arg0, %arg1, %c0_i32 : i32, i32, i32
  }
  func.func @transform_1(%arg0: i32, %arg1: i32) -> (i32, i32) {
    %c0_i32 = arith.constant 0 : i32
    %c0_i32_0 = arith.constant 0 : i32
    %c0_i32_1 = arith.constant 0 : i32
    return %c0_i32, %c0_i32_0 : i32, i32
  }
  func.func @transform_2(%arg0: i32, %arg1: i32) -> (i32, i32) {
    %c0_i32 = arith.constant 0 : i32
    %c0_i32_0 = arith.constant 0 : i32
    %c0_i32_1 = arith.constant 0 : i32
    return %c0_i32, %c0_i32_0 : i32, i32
  }
  func.func @transform_3(%arg0: i32, %arg1: i32) -> (i32, i32) {
    %c0_i32 = arith.constant 0 : i32
    %c0_i32_0 = arith.constant 0 : i32
    %c0_i32_1 = arith.constant 0 : i32
    return %c0_i32, %c0_i32_0 : i32, i32
  }
  func.func @transform_4(%arg0: i32, %arg1: i32) -> (i32, i32, i32) {
    %c0_i32 = arith.constant 0 : i32
    %c0_i32_0 = arith.constant 0 : i32
    return %arg0, %arg1, %c0_i32 : i32, i32, i32
  }
  func.func @transform_5(%arg0: i32, %arg1: i32) -> (i32, i32, i32) {
    %c0_i32 = arith.constant 0 : i32
    %c0_i32_0 = arith.constant 0 : i32
    return %arg0, %arg1, %c0_i32 : i32, i32, i32
  }
  func.func @transform_6(%arg0: i32, %arg1: i32) -> (i32, i32, i32) {
    %c0_i32 = arith.constant 0 : i32
    %c0_i32_0 = arith.constant 0 : i32
    return %arg0, %arg1, %c0_i32 : i32, i32, i32
  }
}

module attributes {stable_mosaic.version = 11 : i64} {
  func.func @_ln_qkv_kernel(%arg0: i32, %arg1: i32, %arg2: memref<1x16x32xf32, #tpu.memory_space<vmem>>, %arg3: memref<1x32xf32, #tpu.memory_space<vmem>>, %arg4: memref<1x32xf32, #tpu.memory_space<vmem>>, %arg5: memref<32x192xbf16, #tpu.memory_space<vmem>>, %arg6: memref<1x16x64xbf16, #tpu.memory_space<vmem>>, %arg7: memref<1x16x64xbf16, #tpu.memory_space<vmem>>, %arg8: memref<1x16x64xbf16, #tpu.memory_space<vmem>>) attributes {dimension_semantics = [#tpu.dimension_semantics<parallel>, #tpu.dimension_semantics<parallel>], iteration_bounds = array<i64: 2, 1>, scalar_prefetch = 0 : i64, scratch_operands = 0 : i64, tpu.core_type = #tpu.core_type<tc>, window_params = [{transform_indices = @transform_0, window_bounds = array<i64: 1, 16, 32>}, {pipeline_mode = #tpu.pipeline_mode<synchronous>, transform_indices = @transform_1, window_bounds = array<i64: 1, 32>}, {pipeline_mode = #tpu.pipeline_mode<synchronous>, transform_indices = @transform_2, window_bounds = array<i64: 1, 32>}, {pipeline_mode = #tpu.pipeline_mode<synchronous>, transform_indices = @transform_3, window_bounds = array<i64: 32, 192>}, {transform_indices = @transform_4, window_bounds = array<i64: 1, 16, 64>}, {transform_indices = @transform_5, window_bounds = array<i64: 1, 16, 64>}, {transform_indices = @transform_6, window_bounds = array<i64: 1, 16, 64>}]} {
    %c0 = arith.constant 0 : index
    %c0_0 = arith.constant 0 : index
    %c0_1 = arith.constant 0 : index
    %0 = vector.load %arg2[%c0, %c0_0, %c0_1] : memref<1x16x32xf32, #tpu.memory_space<vmem>>, vector<1x16x32xf32>
    %1 = vector.shape_cast %0 : vector<1x16x32xf32> to vector<16x32xf32>
    %cst = arith.constant dense<0.000000e+00> : vector<16xf32>
    %2 = vector.multi_reduction <add>, %1, %cst [1] : vector<16x32xf32> to vector<16xf32>
    %3 = vector.shape_cast %2 : vector<16xf32> to vector<16x1xf32>
    %cst_2 = arith.constant 3.200000e+01 : f32
    %4 = vector.broadcast %cst_2 : f32 to vector<16x1xf32>
    %5 = arith.divf %3, %4 : vector<16x1xf32>
    %6 = vector.broadcast %5 : vector<16x1xf32> to vector<16x32xf32>
    %7 = arith.subf %1, %6 : vector<16x32xf32>
    %8 = arith.mulf %7, %7 : vector<16x32xf32>
    %cst_3 = arith.constant dense<0.000000e+00> : vector<16xf32>
    %9 = vector.multi_reduction <add>, %8, %cst_3 [1] : vector<16x32xf32> to vector<16xf32>
    %10 = vector.shape_cast %9 : vector<16xf32> to vector<16x1xf32>
    %cst_4 = arith.constant 3.200000e+01 : f32
    %11 = vector.broadcast %cst_4 : f32 to vector<16x1xf32>
    %12 = arith.divf %10, %11 : vector<16x1xf32>
    %13 = vector.broadcast %5 : vector<16x1xf32> to vector<16x32xf32>
    %14 = arith.subf %1, %13 : vector<16x32xf32>
    %cst_5 = arith.constant 9.99999974E-6 : f32
    %15 = vector.broadcast %cst_5 : f32 to vector<16x1xf32>
    %16 = arith.addf %12, %15 : vector<16x1xf32>
    %17 = math.rsqrt %16 : vector<16x1xf32>
    %18 = vector.broadcast %17 : vector<16x1xf32> to vector<16x32xf32>
    %19 = arith.mulf %14, %18 : vector<16x32xf32>
    %c0_6 = arith.constant 0 : index
    %c0_7 = arith.constant 0 : index
    %20 = vector.load %arg3[%c0_6, %c0_7] : memref<1x32xf32, #tpu.memory_space<vmem>>, vector<1x32xf32>
    %21 = vector.shape_cast %20 : vector<1x32xf32> to vector<32xf32>
    %22 = vector.shape_cast %21 : vector<32xf32> to vector<1x32xf32>
    %23 = vector.broadcast %22 : vector<1x32xf32> to vector<16x32xf32>
    %24 = arith.mulf %19, %23 : vector<16x32xf32>
    %c0_8 = arith.constant 0 : index
    %c0_9 = arith.constant 0 : index
    %25 = vector.load %arg4[%c0_8, %c0_9] : memref<1x32xf32, #tpu.memory_space<vmem>>, vector<1x32xf32>
    %26 = vector.shape_cast %25 : vector<1x32xf32> to vector<32xf32>
    %27 = vector.shape_cast %26 : vector<32xf32> to vector<1x32xf32>
    %28 = vector.broadcast %27 : vector<1x32xf32> to vector<16x32xf32>
    %29 = arith.addf %24, %28 : vector<16x32xf32>
    %30 = arith.truncf %29 : vector<16x32xf32> to vector<16x32xbf16>
    %c0_10 = arith.constant 0 : index
    %c0_11 = arith.constant 0 : index
    %31 = vector.load %arg5[%c0_10, %c0_11] : memref<32x192xbf16, #tpu.memory_space<vmem>>, vector<32x192xbf16>
    %cst_12 = arith.constant dense<0.000000e+00> : vector<16x192xf32>
    %32 = tpu.matmul %30, %31, %cst_12 {dimension_numbers = #tpu.dot_dimension_numbers<[1], [0], [0], [1], [0, 0, 1, 1], [], []>} : vector<16x32xbf16>, vector<32x192xbf16>, vector<16x192xf32> -> vector<16x192xf32>
    %33 = vector.extract_strided_slice %32 {offsets = [0, 0], sizes = [16, 64], strides = [1, 1]} : vector<16x192xf32> to vector<16x64xf32>
    %34 = arith.truncf %33 : vector<16x64xf32> to vector<16x64xbf16>
    %c0_13 = arith.constant 0 : index
    %c0_14 = arith.constant 0 : index
    %c0_15 = arith.constant 0 : index
    %35 = vector.load %arg6[%c0_13, %c0_14, %c0_15] : memref<1x16x64xbf16, #tpu.memory_space<vmem>>, vector<1x16x64xbf16>
    %36 = vector.shape_cast %35 : vector<1x16x64xbf16> to vector<16x64xbf16>
    %37 = vector.shape_cast %34 : vector<16x64xbf16> to vector<1x16x64xbf16>
    tpu.vector_store %arg6[%c0_13, %c0_14, %c0_15], %37 {strides = array<i32>} : memref<1x16x64xbf16, #tpu.memory_space<vmem>>, vector<1x16x64xbf16>,
    %38 = vector.extract_strided_slice %32 {offsets = [0, 64], sizes = [16, 64], strides = [1, 1]} : vector<16x192xf32> to vector<16x64xf32>
    %39 = arith.truncf %38 : vector<16x64xf32> to vector<16x64xbf16>
    %c0_16 = arith.constant 0 : index
    %c0_17 = arith.constant 0 : index
    %c0_18 = arith.constant 0 : index
    %40 = vector.load %arg7[%c0_16, %c0_17, %c0_18] : memref<1x16x64xbf16, #tpu.memory_space<vmem>>, vector<1x16x64xbf16>
    %41 = vector.shape_cast %40 : vector<1x16x64xbf16> to vector<16x64xbf16>
    %42 = vector.shape_cast %39 : vector<16x64xbf16> to vector<1x16x64xbf16>
    tpu.vector_store %arg7[%c0_16, %c0_17, %c0_18], %42 {strides = array<i32>} : memref<1x16x64xbf16, #tpu.memory_space<vmem>>, vector<1x16x64xbf16>,
    %43 = vector.extract_strided_slice %32 {offsets = [0, 128], sizes = [16, 64], strides = [1, 1]} : vector<16x192xf32> to vector<16x64xf32>
    %44 = arith.truncf %43 : vector<16x64xf32> to vector<16x64xbf16>
    %c0_19 = arith.constant 0 : index
    %c0_20 = arith.constant 0 : index
    %c0_21 = arith.constant 0 : index
    %45 = vector.load %arg8[%c0_19, %c0_20, %c0_21] : memref<1x16x64xbf16, #tpu.memory_space<vmem>>, vector<1x16x64xbf16>
    %46 = vector.shape_cast %45 : vector<1x16x64xbf16> to vector<16x64xbf16>
    %47 = vector.shape_cast %44 : vector<16x64xbf16> to vector<1x16x64xbf16>
    tpu.vector_store %arg8[%c0_19, %c0_20, %c0_21], %47 {strides = array<i32>} : memref<1x16x64xbf16, #tpu.memory_space<vmem>>, vector<1x16x64xbf16>,
    return
  }
  func.func @transform_0(%arg0: i32, %arg1: i32) -> (i32, i32, i32) {
    %c0_i32 = arith.constant 0 : i32
    %c0_i32_0 = arith.constant 0 : i32
    return %arg0, %arg1, %c0_i32 : i32, i32, i32
  }
  func.func @transform_1(%arg0: i32, %arg1: i32) -> (i32, i32) {
    %c0_i32 = arith.constant 0 : i32
    %c0_i32_0 = arith.constant 0 : i32
    %c0_i32_1 = arith.constant 0 : i32
    return %c0_i32, %c0_i32_0 : i32, i32
  }
  func.func @transform_2(%arg0: i32, %arg1: i32) -> (i32, i32) {
    %c0_i32 = arith.constant 0 : i32
    %c0_i32_0 = arith.constant 0 : i32
    %c0_i32_1 = arith.constant 0 : i32
    return %c0_i32, %c0_i32_0 : i32, i32
  }
  func.func @transform_3(%arg0: i32, %arg1: i32) -> (i32, i32) {
    %c0_i32 = arith.constant 0 : i32
    %c0_i32_0 = arith.constant 0 : i32
    %c0_i32_1 = arith.constant 0 : i32
    return %c0_i32, %c0_i32_0 : i32, i32
  }
  func.func @transform_4(%arg0: i32, %arg1: i32) -> (i32, i32, i32) {
    %c0_i32 = arith.constant 0 : i32
    %c0_i32_0 = arith.constant 0 : i32
    return %arg0, %arg1, %c0_i32 : i32, i32, i32
  }
  func.func @transform_5(%arg0: i32, %arg1: i32) -> (i32, i32, i32) {
    %c0_i32 = arith.constant 0 : i32
    %c0_i32_0 = arith.constant 0 : i32
    return %arg0, %arg1, %c0_i32 : i32, i32, i32
  }
  func.func @transform_6(%arg0: i32, %arg1: i32) -> (i32, i32, i32) {
    %c0_i32 = arith.constant 0 : i32
    %c0_i32_0 = arith.constant 0 : i32
    return %arg0, %arg1, %c0_i32 : i32, i32, i32
  }
}

</mosaic_0001>

<llo_original>
// kernel: tpu_custom_call.1
$region0: #{tpu_custom_call.1}
  #allocation0 [shape = 'u32[]', space=smem, size = 0x4, offset = 0x4, fixed_abs, tag = 'smem constant byte address 0x4 - core index']
  #allocation1 [shape = 'u32[144,128]{1,0:T(1,128)}', space=vmem, size = 0x12000, scoped, tag = 'internal scratch']
  %s0 = inlined_call_operand.hbm [shape: f32[2,16,32], index: 0, kind: input, shape index: {}]
  %s1 = inlined_call_operand.vmem [shape: f32[1,32], index: 1, kind: input, shape index: {}]
  %s2 = inlined_call_operand.vmem [shape: f32[1,32], index: 2, kind: input, shape index: {}]
  %s3 = inlined_call_operand.hbm [shape: bf16[32,192], index: 3, kind: input, shape index: {}]
  %s4 = inlined_call_operand.hbm [shape: bf16[2,16,64], index: 4, kind: output, shape index: {0}]
  %s5 = inlined_call_operand.hbm [shape: bf16[2,16,64], index: 5, kind: output, shape index: {1}]
  %s6 = inlined_call_operand.hbm [shape: bf16[2,16,64], index: 6, kind: output, shape index: {2}]
  %7 = xla_tuple %s4, %s5, %s6
  %s8 = sld [smem:[#allocation0]]
  $region73: #{tpu_custom_call.1} parent=0
    _
  %s10 = ssub.s32 1, %s8
  %s11 = scalar_select 0, %s10, %s8
  $region1: #{tpu_custom_call.1} parent=0
    #allocation2 [shape = 'u8[16384]{0}', space=vmem, size = 0x4000, scoped, tag = 'input window, operand 0']
    #allocation3 [shape = 's32[2]{0}', space=sflag, size = 0x8, scoped, tag = 'scoped memory for tpu_custom_call.1']
    #allocation4 [shape = 's32[2]{0}', space=sflag, size = 0x8, scoped, tag = 'scoped memory for tpu_custom_call.1']
    #allocation5 [shape = 'u8[16384]{0}', space=vmem, size = 0x4000, scoped, tag = 'input window, operand 3, single buffered']
    #allocation6 [shape = 's32[1]{0}', space=sflag, size = 0x4, scoped, tag = 'scoped memory for tpu_custom_call.1']
    #allocation7 [shape = 'u8[8192]{0}', space=vmem, size = 0x2000, scoped, tag = 'output window, operand 0']
    #allocation8 [shape = 'u8[8192]{0}', space=vmem, size = 0x2000, scoped, tag = 'output window, operand 1']
    #allocation9 [shape = 's32[2]{0}', space=sflag, size = 0x8, scoped, tag = 'scoped memory for tpu_custom_call.1']
    #allocation10 [shape = 'u8[8192]{0}', space=vmem, size = 0x2000, scoped, tag = 'output window, operand 2']
    %12 = vsyncpa [#allocation3], 0
    %s13 = scalar_lea.sflag [#allocation3], 1
    %14 = vsyncpa %s13, 0
    %15 = vsyncpa [#allocation6], 0
    %16 = vsyncpa [#allocation4], 0
    %s17 = scalar_lea.sflag [#allocation4], 1
    %18 = vsyncpa %s17, 0
    %19 = vsyncpa [#allocation9], 0
    %s20 = scalar_lea.sflag [#allocation9], 1
    %21 = vsyncpa %s20, 0
    loop: start=0, step=1, limit=4
    $region2: #{tpu_custom_call.1} parent=1 // loop_pre_header
      _
    $region3: #{tpu_custom_call.1} parent=1 // loop_header
      %s23 = sphi 0, %s27
      %p24 = scmp.ge.s32.totalorder %s23, 4
      %s30 = sphi 0, %s42
      %s31 = sphi 0, %s38
      %s32 = sphi 0, %s30
      %s33 = sphi 0, %s31
      %s34 = sphi 0, %s32
      %s35 = sphi 0, %s33
      %s47 = sphi 0, %s49
      %s50 = sphi 0, %s47
      %s51 = sphi 0, %s50
      %s67 = sphi 0, %s51
      %s71 = sphi 0, %s71
      %s73 = sphi 0, %s71
      %s74 = sphi 0, %s73
      %s88 = sphi 0, %s74
      %s92 = sphi 0, %s92
      %s94 = sphi 0, %s92
      %s95 = sphi 0, %s94
      %s109 = sphi 0, %s95
      %s113 = sphi 0, %s113
      %s115 = sphi 0, %s113
      %s116 = sphi 0, %s115
      %s130 = sphi 0, %s116
      %s138 = sphi 0, %s140
      %s141 = sphi 0, %s138
      %s142 = sphi 0, %s141
      %s158 = sphi 0, %s142
      %s166 = sphi 0, %s168
      %s169 = sphi 0, %s166
      %s170 = sphi 0, %s169
      %s186 = sphi 0, %s170
      %s194 = sphi 0, %s196
      %s197 = sphi 0, %s194
      %s198 = sphi 0, %s197
      %s214 = sphi 0, %s198
    $region4: #{tpu_custom_call.1} parent=1 // loop_header_branch
      %26 = sbr.rel (%p24) target = $region8
    $region5: #{tpu_custom_call.1} parent=1 // loop_body
      %s28 = ssub.s32 %s23, 1
      %s29 = ssub.s32 %s23, 2
      %s36 = sadd.s32 1, %s31
      %p37 = scmp.ge.s32.totalorder %s36, 1
      %s38 = scalar_select %p37, 0, %s36
      %s39 = sadd.s32 1, %s30
      %s40 = scalar_select %p37, %s39, %s30
      %p41 = scmp.ge.s32.totalorder %s40, 2
      %s42 = scalar_select %p41, 0, %s40
      %s43 = ssub.s32 %s30, %s42
      %s44 = ssub.s32 %s31, %s38
      %s45 = sor.u32 %s43, %s44
      %p46 = scmp.eq.s32.totalorder %s45, 0
      %s48 = sadd.s32 %s47, 1
      %s49 = scalar_select %p46, %s47, %s48
      %p52 = pneg %p46
      %p53 = scmp.eq.s32.totalorder %s23, 1
      %p54 = por %p52, %p53
      %p55 = scmp.ne.s32.totalorder %s47, %s50
      %p56 = scmp.eq.s32.totalorder %s23, 0
      %p57 = por %p55, %p56
      %p58 = scmp.ne.s32.totalorder %s47, %s50
      %p59 = scmp.eq.s32.totalorder %s28, 1
      %p60 = por %p58, %p59
      %p61 = scmp.ne.s32.totalorder %s50, %s51
      %p62 = scmp.eq.s32.totalorder %s28, 0
      %p63 = por %p61, %p62
      %p64 = scmp.ne.s32.totalorder %s50, %s51
      %p65 = scmp.eq.s32.totalorder %s29, 1
      %p66 = por %p64, %p65
      %p68 = scmp.ne.s32.totalorder %s51, %s67
      %p69 = scmp.eq.s32.totalorder %s29, 0
      %p70 = por %p68, %p69
      %s72 = sadd.s32 %s71, 1
      %p75 = scmp.eq.s32.totalorder %s23, 1
      %p76 = scmp.ne.s32.totalorder %s71, %s73
      %p77 = scmp.eq.s32.totalorder %s23, 0
      %p78 = por %p76, %p77
      %p79 = scmp.ne.s32.totalorder %s71, %s73
      %p80 = scmp.eq.s32.totalorder %s28, 1
      %p81 = por %p79, %p80
      %p82 = scmp.ne.s32.totalorder %s73, %s74
      %p83 = scmp.eq.s32.totalorder %s28, 0
      %p84 = por %p82, %p83
      %p85 = scmp.ne.s32.totalorder %s73, %s74
      %p86 = scmp.eq.s32.totalorder %s29, 1
      %p87 = por %p85, %p86
      %p89 = scmp.ne.s32.totalorder %s74, %s88
      %p90 = scmp.eq.s32.totalorder %s29, 0
      %p91 = por %p89, %p90
      %s93 = sadd.s32 %s92, 1
      %p96 = scmp.eq.s32.totalorder %s23, 1
      %p97 = scmp.ne.s32.totalorder %s92, %s94
      %p98 = scmp.eq.s32.totalorder %s23, 0
      %p99 = por %p97, %p98
      %p100 = scmp.ne.s32.totalorder %s92, %s94
      %p101 = scmp.eq.s32.totalorder %s28, 1
      %p102 = por %p100, %p101
      %p103 = scmp.ne.s32.totalorder %s94, %s95
      %p104 = scmp.eq.s32.totalorder %s28, 0
      %p105 = por %p103, %p104
      %p106 = scmp.ne.s32.totalorder %s94, %s95
      %p107 = scmp.eq.s32.totalorder %s29, 1
      %p108 = por %p106, %p107
      %p110 = scmp.ne.s32.totalorder %s95, %s109
      %p111 = scmp.eq.s32.totalorder %s29, 0
      %p112 = por %p110, %p111
      %s114 = sadd.s32 %s113, 1
      %p117 = scmp.eq.s32.totalorder %s23, 1
      %p118 = scmp.ne.s32.totalorder %s113, %s115
      %p119 = scmp.eq.s32.totalorder %s23, 0
      %p120 = por %p118, %p119
      %p121 = scmp.ne.s32.totalorder %s113, %s115
      %p122 = scmp.eq.s32.totalorder %s28, 1
      %p123 = por %p121, %p122
      %p124 = scmp.ne.s32.totalorder %s115, %s116
      %p125 = scmp.eq.s32.totalorder %s28, 0
      %p126 = por %p124, %p125
      %p127 = scmp.ne.s32.totalorder %s115, %s116
      %p128 = scmp.eq.s32.totalorder %s29, 1
      %p129 = por %p127, %p128
      %p131 = scmp.ne.s32.totalorder %s116, %s130
      %p132 = scmp.eq.s32.totalorder %s29, 0
      %p133 = por %p131, %p132
      %s134 = ssub.s32 %s30, %s42
      %s135 = ssub.s32 %s31, %s38
      %s136 = sor.u32 %s134, %s135
      %p137 = scmp.eq.s32.totalorder %s136, 0
      %s139 = sadd.s32 %s138, 1
      %s140 = scalar_select %p137, %s138, %s139
      %p143 = pneg %p137
      %p144 = scmp.eq.s32.totalorder %s23, 1
      %p145 = por %p143, %p144
      %p146 = scmp.ne.s32.totalorder %s138, %s141
      %p147 = scmp.eq.s32.totalorder %s23, 0
      %p148 = por %p146, %p147
      %p149 = scmp.ne.s32.totalorder %s138, %s141
      %p150 = scmp.eq.s32.totalorder %s28, 1
      %p151 = por %p149, %p150
      %p152 = scmp.ne.s32.totalorder %s141, %s142
      %p153 = scmp.eq.s32.totalorder %s28, 0
      %p154 = por %p152, %p153
      %p155 = scmp.ne.s32.totalorder %s141, %s142
      %p156 = scmp.eq.s32.totalorder %s29, 1
      %p157 = por %p155, %p156
      %p159 = scmp.ne.s32.totalorder %s142, %s158
      %p160 = scmp.eq.s32.totalorder %s29, 0
      %p161 = por %p159, %p160
      %s162 = ssub.s32 %s30, %s42
      %s163 = ssub.s32 %s31, %s38
      %s164 = sor.u32 %s162, %s163
      %p165 = scmp.eq.s32.totalorder %s164, 0
      %s167 = sadd.s32 %s166, 1
      %s168 = scalar_select %p165, %s166, %s167
      %p171 = pneg %p165
      %p172 = scmp.eq.s32.totalorder %s23, 1
      %p173 = por %p171, %p172
      %p174 = scmp.ne.s32.totalorder %s166, %s169
      %p175 = scmp.eq.s32.totalorder %s23, 0
      %p176 = por %p174, %p175
      %p177 = scmp.ne.s32.totalorder %s166, %s169
      %p178 = scmp.eq.s32.totalorder %s28, 1
      %p179 = por %p177, %p178
      %p180 = scmp.ne.s32.totalorder %s169, %s170
      %p181 = scmp.eq.s32.totalorder %s28, 0
      %p182 = por %p180, %p181
      %p183 = scmp.ne.s32.totalorder %s169, %s170
      %p184 = scmp.eq.s32.totalorder %s29, 1
      %p185 = por %p183, %p184
      %p187 = scmp.ne.s32.totalorder %s170, %s186
      %p188 = scmp.eq.s32.totalorder %s29, 0
      %p189 = por %p187, %p188
      %s190 = ssub.s32 %s30, %s42
      %s191 = ssub.s32 %s31, %s38
      %s192 = sor.u32 %s190, %s191
      %p193 = scmp.eq.s32.totalorder %s192, 0
      %s195 = sadd.s32 %s194, 1
      %s196 = scalar_select %p193, %s194, %s195
      %p199 = pneg %p193
      %p200 = scmp.eq.s32.totalorder %s23, 1
      %p201 = por %p199, %p200
      %p202 = scmp.ne.s32.totalorder %s194, %s197
      %p203 = scmp.eq.s32.totalorder %s23, 0
      %p204 = por %p202, %p203
      %p205 = scmp.ne.s32.totalorder %s194, %s197
      %p206 = scmp.eq.s32.totalorder %s28, 1
      %p207 = por %p205, %p206
      %p208 = scmp.ne.s32.totalorder %s197, %s198
      %p209 = scmp.eq.s32.totalorder %s28, 0
      %p210 = por %p208, %p209
      %p211 = scmp.ne.s32.totalorder %s197, %s198
      %p212 = scmp.eq.s32.totalorder %s29, 1
      %p213 = por %p211, %p212
      %p215 = scmp.ne.s32.totalorder %s198, %s214
      %p216 = scmp.eq.s32.totalorder %s29, 0
      %p217 = por %p215, %p216
      %p218 = scmp.le.s32.totalorder 1, %s23
      %p219 = scmp.lt.s32.totalorder %s23, 3
      %p220 = pnand %p218, %p219
      %p221 = pneg %p220
      // Predicated region
      $region9: #{tpu_custom_call.1} parent=5 // pred_check
        _
      $region10: #{tpu_custom_call.1} parent=5 // pred_check_branch
        %223 = sbr.rel (%p220) target = $region12
      $region11: #{tpu_custom_call.1} parent=5 // pred_region
        %s224 = ssub.s32 %s23, 1
        // Predicated region
        $region13: #{tpu_custom_call.1} parent=11 // pred_check
          %p225 = pneg %p84
        $region14: #{tpu_custom_call.1} parent=11 // pred_check_branch
          %227 = sbr.rel (%p225) target = $region16
        $region15: #{tpu_custom_call.1} parent=11 // pred_region
          _
        $region16: #{tpu_custom_call.1} parent=11 // pred_fallthru
          _
        // Predicated region
        $region17: #{tpu_custom_call.1} parent=11 // pred_check
          %p228 = pneg %p105
        $region18: #{tpu_custom_call.1} parent=11 // pred_check_branch
          %230 = sbr.rel (%p228) target = $region20
        $region19: #{tpu_custom_call.1} parent=11 // pred_region
          _
        $region20: #{tpu_custom_call.1} parent=11 // pred_fallthru
          _
        // Predicated region
        $region21: #{tpu_custom_call.1} parent=11 // pred_check
          %p231 = pneg %p126
        $region22: #{tpu_custom_call.1} parent=11 // pred_check_branch
          %233 = sbr.rel (%p231) target = $region24
        $region23: #{tpu_custom_call.1} parent=11 // pred_region
          %s235 = ssub.s32 512, 512
          %236 = vsyncadd [#allocation6], %s235
          %s237 = sshll.u32 [#allocation5], 4
          %s238 = int_to_ptr.vmem [resolvable:$true] %s237
          %243 = dma.hbm_to_vmem [thread:$0]  %s3, 512, %s238, [#allocation6], 128, 128, 8
        $region24: #{tpu_custom_call.1} parent=11 // pred_fallthru
          _
      $region12: #{tpu_custom_call.1} parent=5 // pred_fallthru
        _
      %p244 = scmp.lt.s32.totalorder %s23, 2
      // Predicated region
      $region25: #{tpu_custom_call.1} parent=5 // pred_check
        %p245 = pneg %p244
      $region26: #{tpu_custom_call.1} parent=5 // pred_check_branch
        %247 = sbr.rel (%p245) target = $region28
      $region27: #{tpu_custom_call.1} parent=5 // pred_region
        // Predicated region
        $region29: #{tpu_custom_call.1} parent=27 // pred_check
          %p248 = pneg %p57
        $region30: #{tpu_custom_call.1} parent=27 // pred_check_branch
          %250 = sbr.rel (%p248) target = $region32
        $region31: #{tpu_custom_call.1} parent=27 // pred_region
          %s251 = sand.u32 %s47, 1
          %s252 = scalar_lea.sflag [#allocation3], %s251
          %s253 = sand.u32 %s47, 1
          %s254 = smul.addr %s253, 16
          %s255 = scalar_lea.vmem [#allocation2], %s254
          %s256 = smul.u32 2, %s31
          %s258 = ssub.s32 256, 256
          %259 = vsyncadd %s252, %s258
          %s260 = smul.addr %s30, 2
          %s261 = sadd.s32 %s256, %s260
          %s262 = smul.addr %s261, 128
          %s263 = scalar_lea.hbm %s0, %s262
          %s264 = sshll.u32 %s255, 4
          %s265 = int_to_ptr.vmem [resolvable:$true] %s264
          %270 = dma.hbm_to_vmem [thread:$0]  %s263, 256, %s265, %s252, 128, 128, 8
        $region32: #{tpu_custom_call.1} parent=27 // pred_fallthru
          _
      $region28: #{tpu_custom_call.1} parent=5 // pred_fallthru
        _
      %p271 = scmp.le.s32.totalorder 1, %s23
      %p272 = scmp.lt.s32.totalorder %s23, 3
      %p273 = pnand %p271, %p272
      %p274 = pneg %p273
      // Predicated region
      $region33: #{tpu_custom_call.1} parent=5 // pred_check
        _
      $region34: #{tpu_custom_call.1} parent=5 // pred_check_branch
        %276 = sbr.rel (%p273) target = $region36
      $region35: #{tpu_custom_call.1} parent=5 // pred_region
        %s277 = ssub.s32 %s23, 1
        %s278 = sand.u32 %s50, 1
        %s279 = scalar_lea.sflag [#allocation3], %s278
        %s280 = sand.u32 %s50, 1
        %s281 = smul.addr %s280, 16
        %s282 = scalar_lea.vmem [#allocation2], %s281
        // Predicated region
        $region37: #{tpu_custom_call.1} parent=35 // pred_check
          %p283 = pneg %p63
        $region38: #{tpu_custom_call.1} parent=35 // pred_check_branch
          %285 = sbr.rel (%p283) target = $region40
        $region39: #{tpu_custom_call.1} parent=35 // pred_region
          %286 = dma.done %s279, 256
        $region40: #{tpu_custom_call.1} parent=35 // pred_fallthru
          _
        // Predicated region
        $region41: #{tpu_custom_call.1} parent=35 // pred_check
          %p287 = pneg %p126
        $region42: #{tpu_custom_call.1} parent=35 // pred_check_branch
          %289 = sbr.rel (%p287) target = $region44
        $region43: #{tpu_custom_call.1} parent=35 // pred_region
          %290 = dma.done [#allocation6], 512
        $region44: #{tpu_custom_call.1} parent=35 // pred_fallthru
          _
        %s291 = sand.u32 %s50, 1
        %s292 = scalar_lea.sflag [#allocation3], %s291
        %s293 = sand.u32 %s50, 1
        %s294 = smul.addr %s293, 16
        %s295 = scalar_lea.vmem [#allocation2], %s294
        %p296 = pneg %p63
        %p297 = pneg %p60
        %p298 = pneg %p84
        %p299 = pneg %p81
        %p300 = pneg %p105
        %p301 = pneg %p102
        %p302 = pneg %p126
        %p303 = pneg %p123
        %p304 = pneg %p154
        %p305 = pneg %p151
        %s306 = sand.u32 %s141, 1
        %s307 = scalar_lea.sflag [#allocation4], %s306
        %s308 = sand.u32 %s141, 1
        %s309 = smul.addr %s308, 8
        %s310 = scalar_lea.vmem [#allocation7], %s309
        %p311 = pneg %p182
        %p312 = pneg %p179
        %s313 = sand.u32 %s28, 1
        %s314 = scalar_lea.sflag [#allocation9], %s313
        %s315 = sand.u32 %s169, 1
        %s316 = smul.addr %s315, 8
        %s317 = scalar_lea.vmem [#allocation8], %s316
        %p318 = pneg %p210
        %p319 = pneg %p207
        %s320 = sand.u32 %s28, 1
        %s321 = scalar_lea.sflag [#allocation9], %s320
        %s322 = sand.u32 %s197, 1
        %s323 = smul.addr %s322, 8
        %s324 = scalar_lea.vmem [#allocation10], %s323
        %s325 = smul.u32 2, %s33
        %s326 = smul.u32 2, %s33
        %s327 = smul.u32 2, %s33
        %s328 = smul.u32 2, %s33
        %v330 = vld [vmem:[%s282] sm:$0xff]
        %v331 = vld [vmem:[%s282 + $0x8] sm:$0xff]
        %vm332 = vcmask 261120
        %v333 = vsel %vm332, %v330, 0.0
        %334 = vadd.xlane.f32.xlu0 %v333
        %v335 = vpop.xlane.xlu0 %334
        %v336 = vsel %vm332, %v331, 0.0
        %337 = vadd.xlane.f32.xlu0 %v336
        %v338 = vpop.xlane.xlu0 %337
        %v339 = vrcp.pop 32.0
        %v340 = vmul.f32 %v335, %v339
        %v341 = vmul.f32 %v338, %v339
        %v342 = vsub.f32 %v330, %v340
        %v343 = vsub.f32 %v331, %v341
        %v344 = vmul.f32 %v342, %v342
        %v345 = vmul.f32 %v343, %v343
        %v346 = vsel %vm332, %v344, 0.0
        %347 = vadd.xlane.f32.xlu0 %v346
        %v348 = vpop.xlane.xlu0 %347
        %v349 = vsel %vm332, %v345, 0.0
        %350 = vadd.xlane.f32.xlu0 %v349
        %v351 = vpop.xlane.xlu0 %350
        %v352 = vmul.f32 %v348, %v339
        %v353 = vmul.f32 %v351, %v339
        %v354 = vadd.f32 %v352, 1e-05
        %v355 = vadd.f32 %v353, 1e-05
        %v356 = vrsqrt.pop %v354
        %v357 = vrsqrt.pop %v355
        %v358 = vmul.f32 %v342, %v356
        %v359 = vmul.f32 %v343, %v357
        %v360 = vld [vmem:[%s1] sm:$0x1]
        %v362 = vlaneseq
        %v363 = vshrl.u32 %v362, 7
        %v364 = vsub.s32 0, %v363
        %v365 = vrot.slane %v360, %v364
        %v367 = vmul.f32 %v358, %v365
        %v368 = vmul.f32 %v359, %v365
        %v369 = vld [vmem:[%s2] sm:$0x1]
        %v371 = vlaneseq
        %v372 = vshrl.u32 %v371, 7
        %v373 = vsub.s32 0, %v372
        %v374 = vrot.slane %v369, %v373
        %v376 = vadd.f32 %v367, %v374
        %v377 = vadd.f32 %v368, %v374
        %v378 = vpack.c.bf16 %v377, %v376
        %v379 = vld [vmem:[#allocation5] sm:$0xff]
        %v380 = vld [vmem:[#allocation5 + $0x8] sm:$0xff]
        %v381 = vld [vmem:[#allocation5 + $0x10] sm:$0xff]
        %v382 = vld [vmem:[#allocation5 + $0x18] sm:$0xff]
        %v387 = vunpack.c.l.b16 %v379
        %v388 = vunpack.c.h.b16 %v379
        %v389 = vunpack.c.l.b16 %v380
        %v390 = vunpack.c.h.b16 %v380
        %v391 = vunpack.c.l.b16 %v381
        %v392 = vunpack.c.h.b16 %v381
        %v393 = vunpack.c.l.b16 %v382
        %v394 = vunpack.c.h.b16 %v382
        %v395 = vpack.c.b16 %v389, %v387
        %v396 = vpack.c.b16 %v390, %v388
        %v397 = vpack.c.b16 %v393, %v391
        %v398 = vpack.c.b16 %v394, %v392
        %v404 = vsel %vm332, %v378, 0
        %406 = vmatprep.subr.bf16.mxu0 %v396
        %407 = vmatpush1.bf16.msra.mxu0 %v395
        %408 = vmatprep.subr.bf16.mxu0 %v398
        %409 = vmatpush1.bf16.msra.mxu0 %v397
        %410 = vmatprep.subr.bf16.mxu0 0
        %411 = vmatpush1.bf16.msra.mxu0 0
        %412 = vmatprep.subr.bf16.mxu0 0
        %413 = vmatpush1.bf16.msra.mxu0 0
        %414 = vmatprep.subr.bf16.mxu0 0
        %415 = vmatpush1.bf16.msra.mxu0 0
        %416 = vmatprep.subr.bf16.mxu0 0
        %417 = vmatpush1.bf16.msra.mxu0 0
        %418 = vmatprep.subr.bf16.mxu0 0
        %419 = vmatpush1.bf16.msra.mxu0 0
        %420 = vmatprep.subr.bf16.mxu0 0
        %421 = vmatpush1.bf16.msra.mxu0 0
        %422 = vmatprep.subr.bf16.mxu0 0
        %423 = vmatpush1.bf16.msra.mxu0 0
        %424 = vmatprep.subr.bf16.mxu0 0
        %425 = vmatpush1.bf16.msra.mxu0 0
        %426 = vmatprep.subr.bf16.mxu0 0
        %427 = vmatpush1.bf16.msra.mxu0 0
        %428 = vmatprep.subr.bf16.mxu0 0
        %429 = vmatpush1.bf16.msra.mxu0 0
        %430 = vmatprep.subr.bf16.mxu0 0
        %431 = vmatpush1.bf16.msra.mxu0 0
        %432 = vmatprep.subr.bf16.mxu0 0
        %433 = vmatpush1.bf16.msra.mxu0 0
        %434 = vmatprep.subr.bf16.mxu0 0
        %435 = vmatpush1.bf16.msra.mxu0 0
        %436 = vmatprep.subr.bf16.mxu0 0
        %437 = vmatpush1.bf16.msra.mxu0 0
        %438 = vmatprep.mubr.bf16.mxu0 0
        %439 = vmatmul.mubr.bf16.gmra.mrb[0].mxu0 %v404
        %v440 = vpop.f32.mrb[0].mxu0
        %v441 = vadd.f32 0.0, %v440
        %v442 = vpop.f32.mrb[0].mxu0
        %v443 = vadd.f32 0.0, %v442
        %v444 = vpop.f32.mrb[0].mxu0
        %v445 = vadd.f32 0.0, %v444
        %v446 = vpop.f32.mrb[0].mxu0
        %v447 = vadd.f32 0.0, %v446
        %448 = vdwg.mxu0
        %v449 = vpack.c.bf16 %v445, %v441
        %v451 = vunpack.c.l.b16 %v449
        %v452 = vunpack.c.h.b16 %v449
        %v453 = vpack.c.b16 %v451, %v451
        %v454 = vpack.c.b16 %v452, %v452
        %vm457 = vcmask 519168
        %458 = vst.msk [vmem:[%s310] sm:$0xf] %vm457, %v453
        %459 = vst.msk [vmem:[%s310 + $0x4] sm:$0xf] %vm457, %v454
        %460 = vrot.lane.b32.xlu0 %v453, 64
        %v461 = vpop.permute.xlu0 %460
        %462 = vrot.lane.b32.xlu0 %v454, 64
        %v463 = vpop.permute.xlu0 %462
        %466 = vst.msk [vmem:[%s317] sm:$0xf] %vm457, %v461
        %467 = vst.msk [vmem:[%s317 + $0x4] sm:$0xf] %vm457, %v463
        %v468 = vpack.c.bf16 %v447, %v443
        %v470 = vunpack.c.l.b16 %v468
        %v471 = vunpack.c.h.b16 %v468
        %v472 = vpack.c.b16 %v470, %v470
        %v473 = vpack.c.b16 %v471, %v471
        %476 = vst.msk [vmem:[%s324] sm:$0xf] %vm457, %v472
        %477 = vst.msk [vmem:[%s324 + $0x4] sm:$0xf] %vm457, %v473
        %s478 = sand.u32 %s141, 1
        %s479 = scalar_lea.sflag [#allocation4], %s478
        %s480 = sand.u32 %s141, 1
        %s481 = smul.addr %s480, 8
        %s482 = scalar_lea.vmem [#allocation7], %s481
        %s483 = sand.u32 %s28, 1
        %s484 = scalar_lea.sflag [#allocation9], %s483
        %s485 = sand.u32 %s169, 1
        %s486 = smul.addr %s485, 8
        %s487 = scalar_lea.vmem [#allocation8], %s486
        %s488 = sand.u32 %s28, 1
        %s489 = scalar_lea.sflag [#allocation9], %s488
        %s490 = sand.u32 %s197, 1
        %s491 = smul.addr %s490, 8
        %s492 = scalar_lea.vmem [#allocation10], %s491
        // Predicated region
        $region45: #{tpu_custom_call.1} parent=35 // pred_check
          %p493 = pneg %p151
        $region46: #{tpu_custom_call.1} parent=35 // pred_check_branch
          %495 = sbr.rel (%p493) target = $region48
        $region47: #{tpu_custom_call.1} parent=35 // pred_region
          %s496 = smul.u32 2, %s33
          %s498 = ssub.s32 128, 128
          %499 = vsyncadd %s479, %s498
          %s500 = smul.addr %s32, 2
          %s501 = sadd.s32 %s496, %s500
          %s502 = smul.addr %s501, 64
          %s503 = scalar_lea.hbm %s4, %s502
          %s504 = sshll.u32 %s482, 4
          %s505 = int_to_ptr.vmem [resolvable:$true] %s504
          %510 = dma.vmem_to_hbm [thread:$0]  %s505, 128, %s503, %s479, 64, 64, 4
        $region48: #{tpu_custom_call.1} parent=35 // pred_fallthru
          _
        // Predicated region
        $region49: #{tpu_custom_call.1} parent=35 // pred_check
          %p511 = pneg %p179
        $region50: #{tpu_custom_call.1} parent=35 // pred_check_branch
          %513 = sbr.rel (%p511) target = $region52
        $region51: #{tpu_custom_call.1} parent=35 // pred_region
          %s514 = smul.u32 2, %s33
          %s516 = ssub.s32 128, 128
          %517 = vsyncadd %s484, %s516
          %s518 = smul.addr %s32, 2
          %s519 = sadd.s32 %s514, %s518
          %s520 = smul.addr %s519, 64
          %s521 = scalar_lea.hbm %s5, %s520
          %s522 = sshll.u32 %s487, 4
          %s523 = int_to_ptr.vmem [resolvable:$true] %s522
          %528 = dma.vmem_to_hbm [thread:$0]  %s523, 128, %s521, %s484, 64, 64, 4
        $region52: #{tpu_custom_call.1} parent=35 // pred_fallthru
          _
        // Predicated region
        $region53: #{tpu_custom_call.1} parent=35 // pred_check
          %p529 = pneg %p207
        $region54: #{tpu_custom_call.1} parent=35 // pred_check_branch
          %531 = sbr.rel (%p529) target = $region56
        $region55: #{tpu_custom_call.1} parent=35 // pred_region
          %s532 = smul.u32 2, %s33
          %s534 = ssub.s32 128, 128
          %535 = vsyncadd %s489, %s534
          %s536 = smul.addr %s32, 2
          %s537 = sadd.s32 %s532, %s536
          %s538 = smul.addr %s537, 64
          %s539 = scalar_lea.hbm %s6, %s538
          %s540 = sshll.u32 %s492, 4
          %s541 = int_to_ptr.vmem [resolvable:$true] %s540
          %546 = dma.vmem_to_hbm [thread:$0]  %s541, 128, %s539, %s489, 64, 64, 4
        $region56: #{tpu_custom_call.1} parent=35 // pred_fallthru
          _
      $region36: #{tpu_custom_call.1} parent=5 // pred_fallthru
        _
      %p547 = scmp.le.s32.totalorder 2, %s23
      // Predicated region
      $region57: #{tpu_custom_call.1} parent=5 // pred_check
        %p548 = pneg %p547
      $region58: #{tpu_custom_call.1} parent=5 // pred_check_branch
        %550 = sbr.rel (%p548) target = $region60
      $region59: #{tpu_custom_call.1} parent=5 // pred_region
        %s551 = ssub.s32 %s23, 2
        // Predicated region
        $region61: #{tpu_custom_call.1} parent=59 // pred_check
          %p552 = pneg %p157
        $region62: #{tpu_custom_call.1} parent=59 // pred_check_branch
          %554 = sbr.rel (%p552) target = $region64
        $region63: #{tpu_custom_call.1} parent=59 // pred_region
          %s555 = sand.u32 %s142, 1
          %s556 = scalar_lea.sflag [#allocation4], %s555
          %s557 = sand.u32 %s142, 1
          %s558 = smul.addr %s557, 8
          %s559 = scalar_lea.vmem [#allocation7], %s558
          %560 = dma.done %s556, 128
        $region64: #{tpu_custom_call.1} parent=59 // pred_fallthru
          _
        // Predicated region
        $region65: #{tpu_custom_call.1} parent=59 // pred_check
          %p561 = pneg %p185
        $region66: #{tpu_custom_call.1} parent=59 // pred_check_branch
          %563 = sbr.rel (%p561) target = $region68
        $region67: #{tpu_custom_call.1} parent=59 // pred_region
          %s564 = sand.u32 %s29, 1
          %s565 = scalar_lea.sflag [#allocation9], %s564
          %s566 = sand.u32 %s170, 1
          %s567 = smul.addr %s566, 8
          %s568 = scalar_lea.vmem [#allocation8], %s567
          %569 = dma.done %s565, 128
        $region68: #{tpu_custom_call.1} parent=59 // pred_fallthru
          _
        // Predicated region
        $region69: #{tpu_custom_call.1} parent=59 // pred_check
          %p570 = pneg %p213
        $region70: #{tpu_custom_call.1} parent=59 // pred_check_branch
          %572 = sbr.rel (%p570) target = $region72
        $region71: #{tpu_custom_call.1} parent=59 // pred_region
          %s573 = sand.u32 %s29, 1
          %s574 = scalar_lea.sflag [#allocation9], %s573
          %s575 = sand.u32 %s198, 1
          %s576 = smul.addr %s575, 8
          %s577 = scalar_lea.vmem [#allocation10], %s576
          %578 = dma.done %s574, 128
        $region72: #{tpu_custom_call.1} parent=59 // pred_fallthru
          _
      $region60: #{tpu_custom_call.1} parent=5 // pred_fallthru
        _
    $region6: #{tpu_custom_call.1} parent=1 // loop_footer
      %s27 = sadd.s32 1, %s23
    $region7: #{tpu_custom_call.1} parent=1 // loop_footer_branch
      %22 = sbr.rel target = $region3
    $region8: #{tpu_custom_call.1} parent=1 // loop_exit
      _
    %579 = vsyncpa [#allocation3], 1
    %s580 = scalar_lea.sflag [#allocation3], 1
    %581 = vsyncpa %s580, 1
    %582 = vsyncpa [#allocation6], 1
    %583 = vsyncpa [#allocation4], 1
    %s584 = scalar_lea.sflag [#allocation4], 1
    %585 = vsyncpa %s584, 1
    %586 = vsyncpa [#allocation9], 1
    %s587 = scalar_lea.sflag [#allocation9], 1
    %588 = vsyncpa %s587, 1

// kernel: tpu_custom_call.1
$region0: #{tpu_custom_call.1}
  #allocation0 [shape = 'u32[]', space=smem, size = 0x4, offset = 0x4, fixed_abs, tag = 'smem constant byte address 0x4 - core index']
  #allocation1 [shape = 'u32[144,128]{1,0:T(1,128)}', space=vmem, size = 0x12000, scoped, tag = 'internal scratch']
  %s0 = inlined_call_operand.hbm [shape: f32[2,16,32], index: 0, kind: input, shape index: {}]
  %s1 = inlined_call_operand.vmem [shape: f32[1,32], index: 1, kind: input, shape index: {}]
  %s2 = inlined_call_operand.vmem [shape: f32[1,32], index: 2, kind: input, shape index: {}]
  %s3 = inlined_call_operand.hbm [shape: bf16[32,192], index: 3, kind: input, shape index: {}]
  %s4 = inlined_call_operand.hbm [shape: bf16[2,16,64], index: 4, kind: output, shape index: {0}]
  %s5 = inlined_call_operand.hbm [shape: bf16[2,16,64], index: 5, kind: output, shape index: {1}]
  %s6 = inlined_call_operand.hbm [shape: bf16[2,16,64], index: 6, kind: output, shape index: {2}]
  %7 = xla_tuple %s4, %s5, %s6
  %s8 = sld [smem:[#allocation0]]
  $region73: #{tpu_custom_call.1} parent=0
    _
  %s10 = ssub.s32 1, %s8
  %s11 = scalar_select 0, %s10, %s8
  $region1: #{tpu_custom_call.1} parent=0
    #allocation2 [shape = 'u8[16384]{0}', space=vmem, size = 0x4000, scoped, tag = 'input window, operand 0']
    #allocation3 [shape = 's32[2]{0}', space=sflag, size = 0x8, scoped, tag = 'scoped memory for tpu_custom_call.1']
    #allocation4 [shape = 's32[2]{0}', space=sflag, size = 0x8, scoped, tag = 'scoped memory for tpu_custom_call.1']
    #allocation5 [shape = 'u8[16384]{0}', space=vmem, size = 0x4000, scoped, tag = 'input window, operand 3, single buffered']
    #allocation6 [shape = 's32[1]{0}', space=sflag, size = 0x4, scoped, tag = 'scoped memory for tpu_custom_call.1']
    #allocation7 [shape = 'u8[8192]{0}', space=vmem, size = 0x2000, scoped, tag = 'output window, operand 0']
    #allocation8 [shape = 'u8[8192]{0}', space=vmem, size = 0x2000, scoped, tag = 'output window, operand 1']
    #allocation9 [shape = 's32[2]{0}', space=sflag, size = 0x8, scoped, tag = 'scoped memory for tpu_custom_call.1']
    #allocation10 [shape = 'u8[8192]{0}', space=vmem, size = 0x2000, scoped, tag = 'output window, operand 2']
    %12 = vsyncpa [#allocation3], 0
    %s13 = scalar_lea.sflag [#allocation3], 1
    %14 = vsyncpa %s13, 0
    %15 = vsyncpa [#allocation6], 0
    %16 = vsyncpa [#allocation4], 0
    %s17 = scalar_lea.sflag [#allocation4], 1
    %18 = vsyncpa %s17, 0
    %19 = vsyncpa [#allocation9], 0
    %s20 = scalar_lea.sflag [#allocation9], 1
    %21 = vsyncpa %s20, 0
    loop: start=0, step=1, limit=4
    $region2: #{tpu_custom_call.1} parent=1 // loop_pre_header
      _
    $region3: #{tpu_custom_call.1} parent=1 // loop_header
      %s23 = sphi 0, %s27
      %p24 = scmp.ge.s32.totalorder %s23, 4
      %s30 = sphi 0, %s42
      %s31 = sphi 0, %s38
      %s32 = sphi 0, %s30
      %s33 = sphi 0, %s31
      %s34 = sphi 0, %s32
      %s35 = sphi 0, %s33
      %s47 = sphi 0, %s49
      %s50 = sphi 0, %s47
      %s51 = sphi 0, %s50
      %s67 = sphi 0, %s51
      %s71 = sphi 0, %s71
      %s73 = sphi 0, %s71
      %s74 = sphi 0, %s73
      %s88 = sphi 0, %s74
      %s92 = sphi 0, %s92
      %s94 = sphi 0, %s92
      %s95 = sphi 0, %s94
      %s109 = sphi 0, %s95
      %s113 = sphi 0, %s113
      %s115 = sphi 0, %s113
      %s116 = sphi 0, %s115
      %s130 = sphi 0, %s116
      %s138 = sphi 0, %s140
      %s141 = sphi 0, %s138
      %s142 = sphi 0, %s141
      %s158 = sphi 0, %s142
      %s166 = sphi 0, %s168
      %s169 = sphi 0, %s166
      %s170 = sphi 0, %s169
      %s186 = sphi 0, %s170
      %s194 = sphi 0, %s196
      %s197 = sphi 0, %s194
      %s198 = sphi 0, %s197
      %s214 = sphi 0, %s198
    $region4: #{tpu_custom_call.1} parent=1 // loop_header_branch
      %26 = sbr.rel (%p24) target = $region8
    $region5: #{tpu_custom_call.1} parent=1 // loop_body
      %s28 = ssub.s32 %s23, 1
      %s29 = ssub.s32 %s23, 2
      %s36 = sadd.s32 1, %s31
      %p37 = scmp.ge.s32.totalorder %s36, 1
      %s38 = scalar_select %p37, 0, %s36
      %s39 = sadd.s32 1, %s30
      %s40 = scalar_select %p37, %s39, %s30
      %p41 = scmp.ge.s32.totalorder %s40, 2
      %s42 = scalar_select %p41, 0, %s40
      %s43 = ssub.s32 %s30, %s42
      %s44 = ssub.s32 %s31, %s38
      %s45 = sor.u32 %s43, %s44
      %p46 = scmp.eq.s32.totalorder %s45, 0
      %s48 = sadd.s32 %s47, 1
      %s49 = scalar_select %p46, %s47, %s48
      %p52 = pneg %p46
      %p53 = scmp.eq.s32.totalorder %s23, 1
      %p54 = por %p52, %p53
      %p55 = scmp.ne.s32.totalorder %s47, %s50
      %p56 = scmp.eq.s32.totalorder %s23, 0
      %p57 = por %p55, %p56
      %p58 = scmp.ne.s32.totalorder %s47, %s50
      %p59 = scmp.eq.s32.totalorder %s28, 1
      %p60 = por %p58, %p59
      %p61 = scmp.ne.s32.totalorder %s50, %s51
      %p62 = scmp.eq.s32.totalorder %s28, 0
      %p63 = por %p61, %p62
      %p64 = scmp.ne.s32.totalorder %s50, %s51
      %p65 = scmp.eq.s32.totalorder %s29, 1
      %p66 = por %p64, %p65
      %p68 = scmp.ne.s32.totalorder %s51, %s67
      %p69 = scmp.eq.s32.totalorder %s29, 0
      %p70 = por %p68, %p69
      %s72 = sadd.s32 %s71, 1
      %p75 = scmp.eq.s32.totalorder %s23, 1
      %p76 = scmp.ne.s32.totalorder %s71, %s73
      %p77 = scmp.eq.s32.totalorder %s23, 0
      %p78 = por %p76, %p77
      %p79 = scmp.ne.s32.totalorder %s71, %s73
      %p80 = scmp.eq.s32.totalorder %s28, 1
      %p81 = por %p79, %p80
      %p82 = scmp.ne.s32.totalorder %s73, %s74
      %p83 = scmp.eq.s32.totalorder %s28, 0
      %p84 = por %p82, %p83
      %p85 = scmp.ne.s32.totalorder %s73, %s74
      %p86 = scmp.eq.s32.totalorder %s29, 1
      %p87 = por %p85, %p86
      %p89 = scmp.ne.s32.totalorder %s74, %s88
      %p90 = scmp.eq.s32.totalorder %s29, 0
      %p91 = por %p89, %p90
      %s93 = sadd.s32 %s92, 1
      %p96 = scmp.eq.s32.totalorder %s23, 1
      %p97 = scmp.ne.s32.totalorder %s92, %s94
      %p98 = scmp.eq.s32.totalorder %s23, 0
      %p99 = por %p97, %p98
      %p100 = scmp.ne.s32.totalorder %s92, %s94
      %p101 = scmp.eq.s32.totalorder %s28, 1
      %p102 = por %p100, %p101
      %p103 = scmp.ne.s32.totalorder %s94, %s95
      %p104 = scmp.eq.s32.totalorder %s28, 0
      %p105 = por %p103, %p104
      %p106 = scmp.ne.s32.totalorder %s94, %s95
      %p107 = scmp.eq.s32.totalorder %s29, 1
      %p108 = por %p106, %p107
      %p110 = scmp.ne.s32.totalorder %s95, %s109
      %p111 = scmp.eq.s32.totalorder %s29, 0
      %p112 = por %p110, %p111
      %s114 = sadd.s32 %s113, 1
      %p117 = scmp.eq.s32.totalorder %s23, 1
      %p118 = scmp.ne.s32.totalorder %s113, %s115
      %p119 = scmp.eq.s32.totalorder %s23, 0
      %p120 = por %p118, %p119
      %p121 = scmp.ne.s32.totalorder %s113, %s115
      %p122 = scmp.eq.s32.totalorder %s28, 1
      %p123 = por %p121, %p122
      %p124 = scmp.ne.s32.totalorder %s115, %s116
      %p125 = scmp.eq.s32.totalorder %s28, 0
      %p126 = por %p124, %p125
      %p127 = scmp.ne.s32.totalorder %s115, %s116
      %p128 = scmp.eq.s32.totalorder %s29, 1
      %p129 = por %p127, %p128
      %p131 = scmp.ne.s32.totalorder %s116, %s130
      %p132 = scmp.eq.s32.totalorder %s29, 0
      %p133 = por %p131, %p132
      %s134 = ssub.s32 %s30, %s42
      %s135 = ssub.s32 %s31, %s38
      %s136 = sor.u32 %s134, %s135
      %p137 = scmp.eq.s32.totalorder %s136, 0
      %s139 = sadd.s32 %s138, 1
      %s140 = scalar_select %p137, %s138, %s139
      %p143 = pneg %p137
      %p144 = scmp.eq.s32.totalorder %s23, 1
      %p145 = por %p143, %p144
      %p146 = scmp.ne.s32.totalorder %s138, %s141
      %p147 = scmp.eq.s32.totalorder %s23, 0
      %p148 = por %p146, %p147
      %p149 = scmp.ne.s32.totalorder %s138, %s141
      %p150 = scmp.eq.s32.totalorder %s28, 1
      %p151 = por %p149, %p150
      %p152 = scmp.ne.s32.totalorder %s141, %s142
      %p153 = scmp.eq.s32.totalorder %s28, 0
      %p154 = por %p152, %p153
      %p155 = scmp.ne.s32.totalorder %s141, %s142
      %p156 = scmp.eq.s32.totalorder %s29, 1
      %p157 = por %p155, %p156
      %p159 = scmp.ne.s32.totalorder %s142, %s158
      %p160 = scmp.eq.s32.totalorder %s29, 0
      %p161 = por %p159, %p160
      %s162 = ssub.s32 %s30, %s42
      %s163 = ssub.s32 %s31, %s38
      %s164 = sor.u32 %s162, %s163
      %p165 = scmp.eq.s32.totalorder %s164, 0
      %s167 = sadd.s32 %s166, 1
      %s168 = scalar_select %p165, %s166, %s167
      %p171 = pneg %p165
      %p172 = scmp.eq.s32.totalorder %s23, 1
      %p173 = por %p171, %p172
      %p174 = scmp.ne.s32.totalorder %s166, %s169
      %p175 = scmp.eq.s32.totalorder %s23, 0
      %p176 = por %p174, %p175
      %p177 = scmp.ne.s32.totalorder %s166, %s169
      %p178 = scmp.eq.s32.totalorder %s28, 1
      %p179 = por %p177, %p178
      %p180 = scmp.ne.s32.totalorder %s169, %s170
      %p181 = scmp.eq.s32.totalorder %s28, 0
      %p182 = por %p180, %p181
      %p183 = scmp.ne.s32.totalorder %s169, %s170
      %p184 = scmp.eq.s32.totalorder %s29, 1
      %p185 = por %p183, %p184
      %p187 = scmp.ne.s32.totalorder %s170, %s186
      %p188 = scmp.eq.s32.totalorder %s29, 0
      %p189 = por %p187, %p188
      %s190 = ssub.s32 %s30, %s42
      %s191 = ssub.s32 %s31, %s38
      %s192 = sor.u32 %s190, %s191
      %p193 = scmp.eq.s32.totalorder %s192, 0
      %s195 = sadd.s32 %s194, 1
      %s196 = scalar_select %p193, %s194, %s195
      %p199 = pneg %p193
      %p200 = scmp.eq.s32.totalorder %s23, 1
      %p201 = por %p199, %p200
      %p202 = scmp.ne.s32.totalorder %s194, %s197
      %p203 = scmp.eq.s32.totalorder %s23, 0
      %p204 = por %p202, %p203
      %p205 = scmp.ne.s32.totalorder %s194, %s197
      %p206 = scmp.eq.s32.totalorder %s28, 1
      %p207 = por %p205, %p206
      %p208 = scmp.ne.s32.totalorder %s197, %s198
      %p209 = scmp.eq.s32.totalorder %s28, 0
      %p210 = por %p208, %p209
      %p211 = scmp.ne.s32.totalorder %s197, %s198
      %p212 = scmp.eq.s32.totalorder %s29, 1
      %p213 = por %p211, %p212
      %p215 = scmp.ne.s32.totalorder %s198, %s214
      %p216 = scmp.eq.s32.totalorder %s29, 0
      %p217 = por %p215, %p216
      %p218 = scmp.le.s32.totalorder 1, %s23
      %p219 = scmp.lt.s32.totalorder %s23, 3
      %p220 = pnand %p218, %p219
      %p221 = pneg %p220
      // Predicated region
      $region9: #{tpu_custom_call.1} parent=5 // pred_check
        _
      $region10: #{tpu_custom_call.1} parent=5 // pred_check_branch
        %223 = sbr.rel (%p220) target = $region12
      $region11: #{tpu_custom_call.1} parent=5 // pred_region
        %s224 = ssub.s32 %s23, 1
        // Predicated region
        $region13: #{tpu_custom_call.1} parent=11 // pred_check
          %p225 = pneg %p84
        $region14: #{tpu_custom_call.1} parent=11 // pred_check_branch
          %227 = sbr.rel (%p225) target = $region16
        $region15: #{tpu_custom_call.1} parent=11 // pred_region
          _
        $region16: #{tpu_custom_call.1} parent=11 // pred_fallthru
          _
        // Predicated region
        $region17: #{tpu_custom_call.1} parent=11 // pred_check
          %p228 = pneg %p105
        $region18: #{tpu_custom_call.1} parent=11 // pred_check_branch
          %230 = sbr.rel (%p228) target = $region20
        $region19: #{tpu_custom_call.1} parent=11 // pred_region
          _
        $region20: #{tpu_custom_call.1} parent=11 // pred_fallthru
          _
        // Predicated region
        $region21: #{tpu_custom_call.1} parent=11 // pred_check
          %p231 = pneg %p126
        $region22: #{tpu_custom_call.1} parent=11 // pred_check_branch
          %233 = sbr.rel (%p231) target = $region24
        $region23: #{tpu_custom_call.1} parent=11 // pred_region
          %s235 = ssub.s32 512, 512
          %236 = vsyncadd [#allocation6], %s235
          %s237 = sshll.u32 [#allocation5], 4
          %s238 = int_to_ptr.vmem [resolvable:$true] %s237
          %243 = dma.hbm_to_vmem [thread:$0]  %s3, 512, %s238, [#allocation6], 128, 128, 8
        $region24: #{tpu_custom_call.1} parent=11 // pred_fallthru
          _
      $region12: #{tpu_custom_call.1} parent=5 // pred_fallthru
        _
      %p244 = scmp.lt.s32.totalorder %s23, 2
      // Predicated region
      $region25: #{tpu_custom_call.1} parent=5 // pred_check
        %p245 = pneg %p244
      $region26: #{tpu_custom_call.1} parent=5 // pred_check_branch
        %247 = sbr.rel (%p245) target = $region28
      $region27: #{tpu_custom_call.1} parent=5 // pred_region
        // Predicated region
        $region29: #{tpu_custom_call.1} parent=27 // pred_check
          %p248 = pneg %p57
        $region30: #{tpu_custom_call.1} parent=27 // pred_check_branch
          %250 = sbr.rel (%p248) target = $region32
        $region31: #{tpu_custom_call.1} parent=27 // pred_region
          %s251 = sand.u32 %s47, 1
          %s252 = scalar_lea.sflag [#allocation3], %s251
          %s253 = sand.u32 %s47, 1
          %s254 = smul.addr %s253, 16
          %s255 = scalar_lea.vmem [#allocation2], %s254
          %s256 = smul.u32 2, %s31
          %s258 = ssub.s32 256, 256
          %259 = vsyncadd %s252, %s258
          %s260 = smul.addr %s30, 2
          %s261 = sadd.s32 %s256, %s260
          %s262 = smul.addr %s261, 128
          %s263 = scalar_lea.hbm %s0, %s262
          %s264 = sshll.u32 %s255, 4
          %s265 = int_to_ptr.vmem [resolvable:$true] %s264
          %270 = dma.hbm_to_vmem [thread:$0]  %s263, 256, %s265, %s252, 128, 128, 8
        $region32: #{tpu_custom_call.1} parent=27 // pred_fallthru
          _
      $region28: #{tpu_custom_call.1} parent=5 // pred_fallthru
        _
      %p271 = scmp.le.s32.totalorder 1, %s23
      %p272 = scmp.lt.s32.totalorder %s23, 3
      %p273 = pnand %p271, %p272
      %p274 = pneg %p273
      // Predicated region
      $region33: #{tpu_custom_call.1} parent=5 // pred_check
        _
      $region34: #{tpu_custom_call.1} parent=5 // pred_check_branch
        %276 = sbr.rel (%p273) target = $region36
      $region35: #{tpu_custom_call.1} parent=5 // pred_region
        %s277 = ssub.s32 %s23, 1
        %s278 = sand.u32 %s50, 1
        %s279 = scalar_lea.sflag [#allocation3], %s278
        %s280 = sand.u32 %s50, 1
        %s281 = smul.addr %s280, 16
        %s282 = scalar_lea.vmem [#allocation2], %s281
        // Predicated region
        $region37: #{tpu_custom_call.1} parent=35 // pred_check
          %p283 = pneg %p63
        $region38: #{tpu_custom_call.1} parent=35 // pred_check_branch
          %285 = sbr.rel (%p283) target = $region40
        $region39: #{tpu_custom_call.1} parent=35 // pred_region
          %286 = dma.done %s279, 256
        $region40: #{tpu_custom_call.1} parent=35 // pred_fallthru
          _
        // Predicated region
        $region41: #{tpu_custom_call.1} parent=35 // pred_check
          %p287 = pneg %p126
        $region42: #{tpu_custom_call.1} parent=35 // pred_check_branch
          %289 = sbr.rel (%p287) target = $region44
        $region43: #{tpu_custom_call.1} parent=35 // pred_region
          %290 = dma.done [#allocation6], 512
        $region44: #{tpu_custom_call.1} parent=35 // pred_fallthru
          _
        %s291 = sand.u32 %s50, 1
        %s292 = scalar_lea.sflag [#allocation3], %s291
        %s293 = sand.u32 %s50, 1
        %s294 = smul.addr %s293, 16
        %s295 = scalar_lea.vmem [#allocation2], %s294
        %p296 = pneg %p63
        %p297 = pneg %p60
        %p298 = pneg %p84
        %p299 = pneg %p81
        %p300 = pneg %p105
        %p301 = pneg %p102
        %p302 = pneg %p126
        %p303 = pneg %p123
        %p304 = pneg %p154
        %p305 = pneg %p151
        %s306 = sand.u32 %s141, 1
        %s307 = scalar_lea.sflag [#allocation4], %s306
        %s308 = sand.u32 %s141, 1
        %s309 = smul.addr %s308, 8
        %s310 = scalar_lea.vmem [#allocation7], %s309
        %p311 = pneg %p182
        %p312 = pneg %p179
        %s313 = sand.u32 %s28, 1
        %s314 = scalar_lea.sflag [#allocation9], %s313
        %s315 = sand.u32 %s169, 1
        %s316 = smul.addr %s315, 8
        %s317 = scalar_lea.vmem [#allocation8], %s316
        %p318 = pneg %p210
        %p319 = pneg %p207
        %s320 = sand.u32 %s28, 1
        %s321 = scalar_lea.sflag [#allocation9], %s320
        %s322 = sand.u32 %s197, 1
        %s323 = smul.addr %s322, 8
        %s324 = scalar_lea.vmem [#allocation10], %s323
        %s325 = smul.u32 2, %s33
        %s326 = smul.u32 2, %s33
        %s327 = smul.u32 2, %s33
        %s328 = smul.u32 2, %s33
        %v330 = vld [vmem:[%s282] sm:$0xff]
        %v331 = vld [vmem:[%s282 + $0x8] sm:$0xff]
        %vm332 = vcmask 261120
        %v333 = vsel %vm332, %v330, 0.0
        %334 = vadd.xlane.f32.xlu0 %v333
        %v335 = vpop.xlane.xlu0 %334
        %v336 = vsel %vm332, %v331, 0.0
        %337 = vadd.xlane.f32.xlu0 %v336
        %v338 = vpop.xlane.xlu0 %337
        %v339 = vrcp.pop 32.0
        %v340 = vmul.f32 %v335, %v339
        %v341 = vmul.f32 %v338, %v339
        %v342 = vsub.f32 %v330, %v340
        %v343 = vsub.f32 %v331, %v341
        %v344 = vmul.f32 %v342, %v342
        %v345 = vmul.f32 %v343, %v343
        %v346 = vsel %vm332, %v344, 0.0
        %347 = vadd.xlane.f32.xlu0 %v346
        %v348 = vpop.xlane.xlu0 %347
        %v349 = vsel %vm332, %v345, 0.0
        %350 = vadd.xlane.f32.xlu0 %v349
        %v351 = vpop.xlane.xlu0 %350
        %v352 = vmul.f32 %v348, %v339
        %v353 = vmul.f32 %v351, %v339
        %v354 = vadd.f32 %v352, 1e-05
        %v355 = vadd.f32 %v353, 1e-05
        %v356 = vrsqrt.pop %v354
        %v357 = vrsqrt.pop %v355
        %v358 = vmul.f32 %v342, %v356
        %v359 = vmul.f32 %v343, %v357
        %v360 = vld [vmem:[%s1] sm:$0x1]
        %v362 = vlaneseq
        %v363 = vshrl.u32 %v362, 7
        %v364 = vsub.s32 0, %v363
        %v365 = vrot.slane %v360, %v364
        %v367 = vmul.f32 %v358, %v365
        %v368 = vmul.f32 %v359, %v365
        %v369 = vld [vmem:[%s2] sm:$0x1]
        %v371 = vlaneseq
        %v372 = vshrl.u32 %v371, 7
        %v373 = vsub.s32 0, %v372
        %v374 = vrot.slane %v369, %v373
        %v376 = vadd.f32 %v367, %v374
        %v377 = vadd.f32 %v368, %v374
        %v378 = vpack.c.bf16 %v377, %v376
        %v379 = vld [vmem:[#allocation5] sm:$0xff]
        %v380 = vld [vmem:[#allocation5 + $0x8] sm:$0xff]
        %v381 = vld [vmem:[#allocation5 + $0x10] sm:$0xff]
        %v382 = vld [vmem:[#allocation5 + $0x18] sm:$0xff]
        %v387 = vunpack.c.l.b16 %v379
        %v388 = vunpack.c.h.b16 %v379
        %v389 = vunpack.c.l.b16 %v380
        %v390 = vunpack.c.h.b16 %v380
        %v391 = vunpack.c.l.b16 %v381
        %v392 = vunpack.c.h.b16 %v381
        %v393 = vunpack.c.l.b16 %v382
        %v394 = vunpack.c.h.b16 %v382
        %v395 = vpack.c.b16 %v389, %v387
        %v396 = vpack.c.b16 %v390, %v388
        %v397 = vpack.c.b16 %v393, %v391
        %v398 = vpack.c.b16 %v394, %v392
        %v404 = vsel %vm332, %v378, 0
        %406 = vmatprep.subr.bf16.mxu0 %v396
        %407 = vmatpush1.bf16.msra.mxu0 %v395
        %408 = vmatprep.subr.bf16.mxu0 %v398
        %409 = vmatpush1.bf16.msra.mxu0 %v397
        %410 = vmatprep.subr.bf16.mxu0 0
        %411 = vmatpush1.bf16.msra.mxu0 0
        %412 = vmatprep.subr.bf16.mxu0 0
        %413 = vmatpush1.bf16.msra.mxu0 0
        %414 = vmatprep.subr.bf16.mxu0 0
        %415 = vmatpush1.bf16.msra.mxu0 0
        %416 = vmatprep.subr.bf16.mxu0 0
        %417 = vmatpush1.bf16.msra.mxu0 0
        %418 = vmatprep.subr.bf16.mxu0 0
        %419 = vmatpush1.bf16.msra.mxu0 0
        %420 = vmatprep.subr.bf16.mxu0 0
        %421 = vmatpush1.bf16.msra.mxu0 0
        %422 = vmatprep.subr.bf16.mxu0 0
        %423 = vmatpush1.bf16.msra.mxu0 0
        %424 = vmatprep.subr.bf16.mxu0 0
        %425 = vmatpush1.bf16.msra.mxu0 0
        %426 = vmatprep.subr.bf16.mxu0 0
        %427 = vmatpush1.bf16.msra.mxu0 0
        %428 = vmatprep.subr.bf16.mxu0 0
        %429 = vmatpush1.bf16.msra.mxu0 0
        %430 = vmatprep.subr.bf16.mxu0 0
        %431 = vmatpush1.bf16.msra.mxu0 0
        %432 = vmatprep.subr.bf16.mxu0 0
        %433 = vmatpush1.bf16.msra.mxu0 0
        %434 = vmatprep.subr.bf16.mxu0 0
        %435 = vmatpush1.bf16.msra.mxu0 0
        %436 = vmatprep.subr.bf16.mxu0 0
        %437 = vmatpush1.bf16.msra.mxu0 0
        %438 = vmatprep.mubr.bf16.mxu0 0
        %439 = vmatmul.mubr.bf16.gmra.mrb[0].mxu0 %v404
        %v440 = vpop.f32.mrb[0].mxu0
        %v441 = vadd.f32 0.0, %v440
        %v442 = vpop.f32.mrb[0].mxu0
        %v443 = vadd.f32 0.0, %v442
        %v444 = vpop.f32.mrb[0].mxu0
        %v445 = vadd.f32 0.0, %v444
        %v446 = vpop.f32.mrb[0].mxu0
        %v447 = vadd.f32 0.0, %v446
        %448 = vdwg.mxu0
        %v449 = vpack.c.bf16 %v445, %v441
        %v451 = vunpack.c.l.b16 %v449
        %v452 = vunpack.c.h.b16 %v449
        %v453 = vpack.c.b16 %v451, %v451
        %v454 = vpack.c.b16 %v452, %v452
        %vm457 = vcmask 519168
        %458 = vst.msk [vmem:[%s310] sm:$0xf] %vm457, %v453
        %459 = vst.msk [vmem:[%s310 + $0x4] sm:$0xf] %vm457, %v454
        %460 = vrot.lane.b32.xlu0 %v453, 64
        %v461 = vpop.permute.xlu0 %460
        %462 = vrot.lane.b32.xlu0 %v454, 64
        %v463 = vpop.permute.xlu0 %462
        %466 = vst.msk [vmem:[%s317] sm:$0xf] %vm457, %v461
        %467 = vst.msk [vmem:[%s317 + $0x4] sm:$0xf] %vm457, %v463
        %v468 = vpack.c.bf16 %v447, %v443
        %v470 = vunpack.c.l.b16 %v468
        %v471 = vunpack.c.h.b16 %v468
        %v472 = vpack.c.b16 %v470, %v470
        %v473 = vpack.c.b16 %v471, %v471
        %476 = vst.msk [vmem:[%s324] sm:$0xf] %vm457, %v472
        %477 = vst.msk [vmem:[%s324 + $0x4] sm:$0xf] %vm457, %v473
        %s478 = sand.u32 %s141, 1
        %s479 = scalar_lea.sflag [#allocation4], %s478
        %s480 = sand.u32 %s141, 1
        %s481 = smul.addr %s480, 8
        %s482 = scalar_lea.vmem [#allocation7], %s481
        %s483 = sand.u32 %s28, 1
        %s484 = scalar_lea.sflag [#allocation9], %s483
        %s485 = sand.u32 %s169, 1
        %s486 = smul.addr %s485, 8
        %s487 = scalar_lea.vmem [#allocation8], %s486
        %s488 = sand.u32 %s28, 1
        %s489 = scalar_lea.sflag [#allocation9], %s488
        %s490 = sand.u32 %s197, 1
        %s491 = smul.addr %s490, 8
        %s492 = scalar_lea.vmem [#allocation10], %s491
        // Predicated region
        $region45: #{tpu_custom_call.1} parent=35 // pred_check
          %p493 = pneg %p151
        $region46: #{tpu_custom_call.1} parent=35 // pred_check_branch
          %495 = sbr.rel (%p493) target = $region48
        $region47: #{tpu_custom_call.1} parent=35 // pred_region
          %s496 = smul.u32 2, %s33
          %s498 = ssub.s32 128, 128
          %499 = vsyncadd %s479, %s498
          %s500 = smul.addr %s32, 2
          %s501 = sadd.s32 %s496, %s500
          %s502 = smul.addr %s501, 64
          %s503 = scalar_lea.hbm %s4, %s502
          %s504 = sshll.u32 %s482, 4
          %s505 = int_to_ptr.vmem [resolvable:$true] %s504
          %510 = dma.vmem_to_hbm [thread:$0]  %s505, 128, %s503, %s479, 64, 64, 4
        $region48: #{tpu_custom_call.1} parent=35 // pred_fallthru
          _
        // Predicated region
        $region49: #{tpu_custom_call.1} parent=35 // pred_check
          %p511 = pneg %p179
        $region50: #{tpu_custom_call.1} parent=35 // pred_check_branch
          %513 = sbr.rel (%p511) target = $region52
        $region51: #{tpu_custom_call.1} parent=35 // pred_region
          %s514 = smul.u32 2, %s33
          %s516 = ssub.s32 128, 128
          %517 = vsyncadd %s484, %s516
          %s518 = smul.addr %s32, 2
          %s519 = sadd.s32 %s514, %s518
          %s520 = smul.addr %s519, 64
          %s521 = scalar_lea.hbm %s5, %s520
          %s522 = sshll.u32 %s487, 4
          %s523 = int_to_ptr.vmem [resolvable:$true] %s522
          %528 = dma.vmem_to_hbm [thread:$0]  %s523, 128, %s521, %s484, 64, 64, 4
        $region52: #{tpu_custom_call.1} parent=35 // pred_fallthru
          _
        // Predicated region
        $region53: #{tpu_custom_call.1} parent=35 // pred_check
          %p529 = pneg %p207
        $region54: #{tpu_custom_call.1} parent=35 // pred_check_branch
          %531 = sbr.rel (%p529) target = $region56
        $region55: #{tpu_custom_call.1} parent=35 // pred_region
          %s532 = smul.u32 2, %s33
          %s534 = ssub.s32 128, 128
          %535 = vsyncadd %s489, %s534
          %s536 = smul.addr %s32, 2
          %s537 = sadd.s32 %s532, %s536
          %s538 = smul.addr %s537, 64
          %s539 = scalar_lea.hbm %s6, %s538
          %s540 = sshll.u32 %s492, 4
          %s541 = int_to_ptr.vmem [resolvable:$true] %s540
          %546 = dma.vmem_to_hbm [thread:$0]  %s541, 128, %s539, %s489, 64, 64, 4
        $region56: #{tpu_custom_call.1} parent=35 // pred_fallthru
          _
      $region36: #{tpu_custom_call.1} parent=5 // pred_fallthru
        _
      %p547 = scmp.le.s32.totalorder 2, %s23
      // Predicated region
      $region57: #{tpu_custom_call.1} parent=5 // pred_check
        %p548 = pneg %p547
      $region58: #{tpu_custom_call.1} parent=5 // pred_check_branch
        %550 = sbr.rel (%p548) target = $region60
      $region59: #{tpu_custom_call.1} parent=5 // pred_region
        %s551 = ssub.s32 %s23, 2
        // Predicated region
        $region61: #{tpu_custom_call.1} parent=59 // pred_check
          %p552 = pneg %p157
        $region62: #{tpu_custom_call.1} parent=59 // pred_check_branch
          %554 = sbr.rel (%p552) target = $region64
        $region63: #{tpu_custom_call.1} parent=59 // pred_region
          %s555 = sand.u32 %s142, 1
          %s556 = scalar_lea.sflag [#allocation4], %s555
          %s557 = sand.u32 %s142, 1
          %s558 = smul.addr %s557, 8
          %s559 = scalar_lea.vmem [#allocation7], %s558
          %560 = dma.done %s556, 128
        $region64: #{tpu_custom_call.1} parent=59 // pred_fallthru
          _
        // Predicated region
        $region65: #{tpu_custom_call.1} parent=59 // pred_check
          %p561 = pneg %p185
        $region66: #{tpu_custom_call.1} parent=59 // pred_check_branch
          %563 = sbr.rel (%p561) target = $region68
        $region67: #{tpu_custom_call.1} parent=59 // pred_region
          %s564 = sand.u32 %s29, 1
          %s565 = scalar_lea.sflag [#allocation9], %s564
          %s566 = sand.u32 %s170, 1
          %s567 = smul.addr %s566, 8
          %s568 = scalar_lea.vmem [#allocation8], %s567
          %569 = dma.done %s565, 128
        $region68: #{tpu_custom_call.1} parent=59 // pred_fallthru
          _
        // Predicated region
        $region69: #{tpu_custom_call.1} parent=59 // pred_check
          %p570 = pneg %p213
        $region70: #{tpu_custom_call.1} parent=59 // pred_check_branch
          %572 = sbr.rel (%p570) target = $region72
        $region71: #{tpu_custom_call.1} parent=59 // pred_region
          %s573 = sand.u32 %s29, 1
          %s574 = scalar_lea.sflag [#allocation9], %s573
          %s575 = sand.u32 %s198, 1
          %s576 = smul.addr %s575, 8
          %s577 = scalar_lea.vmem [#allocation10], %s576
          %578 = dma.done %s574, 128
        $region72: #{tpu_custom_call.1} parent=59 // pred_fallthru
          _
      $region60: #{tpu_custom_call.1} parent=5 // pred_fallthru
        _
    $region6: #{tpu_custom_call.1} parent=1 // loop_footer
      %s27 = sadd.s32 1, %s23
    $region7: #{tpu_custom_call.1} parent=1 // loop_footer_branch
      %22 = sbr.rel target = $region3
    $region8: #{tpu_custom_call.1} parent=1 // loop_exit
      _
    %579 = vsyncpa [#allocation3], 1
    %s580 = scalar_lea.sflag [#allocation3], 1
    %581 = vsyncpa %s580, 1
    %582 = vsyncpa [#allocation6], 1
    %583 = vsyncpa [#allocation4], 1
    %s584 = scalar_lea.sflag [#allocation4], 1
    %585 = vsyncpa %s584, 1
    %586 = vsyncpa [#allocation9], 1
    %s587 = scalar_lea.sflag [#allocation9], 1
    %588 = vsyncpa %s587, 1

</llo_original>
